<compile_context>
chip_gen: v7x
topology: tpu7x:2x2x1
jax: 0.10.0
libtpu: 0.0.40
codegen_flags: <defaults>
</compile_context>

<pallas_src>
import functools

import jax
import jax.numpy as jnp
from jax.experimental import pallas as pl
from jax.experimental.pallas import tpu as pltpu

# ---- ConvBlock hyperparameters (PyTorch defaults) ---------------------------
FILTER_W1 = 6          # conv1 / conv3 kernel size
FILTER_W2 = 5          # conv2 kernel size
HID1 = 45              # hidden_channels1
HID2 = 64              # hidden_channels2
MAXPOOL_W = 2
OUT_NODES = 64         # convblock_out_nodes
LRELU_SLOPE = 0.01     # F.leaky_relu default negative_slope
BN_EPS = 1e-5
TAP_PAD1 = 8           # conv1 taps padded 6 -> 8 (sublane-aligned contraction)


def _leaky_relu(v):
    return jnp.where(v > 0, v, LRELU_SLOPE * v)


def _bn_rows(v, mask=None, count=None):
    """Single-pass batch norm over rows, per channel, no affine.

    `mask` selects the rows contributing to the statistics and `count` is the
    number of selected rows.  Rows excluded by the mask are still normalized,
    but their values are never consumed downstream."""
    if mask is None:
        s = jnp.sum(v, axis=0, keepdims=True)
        ss = jnp.sum(v * v, axis=0, keepdims=True)
        n = v.shape[0]
    else:
        s = jnp.sum(v * mask, axis=0, keepdims=True)
        ss = jnp.sum(v * v * mask, axis=0, keepdims=True)
        n = count
    mean = s / n
    var = ss / n - mean * mean
    return (v - mean) * jax.lax.rsqrt(var + BN_EPS)


# ---- Pallas kernel ----------------------------------------------------------
def _convblock_kernel(B, P1, P2, M2, cdt,
                      pe_ref, po_ref, w1_ref, b1_ref, w2_ref, b2_ref,
                      w3_ref, b3_ref, wo_ref, bo_ref,
                      out_ref, h1_ref, h2_ref):
    half1 = P1 // 2   # per-batch row period of the (gapped) stage-2 pooled layout

    # ---- stage 1: conv1 as one im2col matmul per parity; maxpool fused -------
    w1 = w1_ref[...]
    b1 = b1_ref[...]
    act_e = _leaky_relu(jnp.dot(pe_ref[...], w1,
                                preferred_element_type=jnp.float32) + b1)
    act_o = _leaky_relu(jnp.dot(po_ref[...], w1,
                                preferred_element_type=jnp.float32) + b1)
    # maxpool1 = max(even, odd) positions (pure elementwise, stays in vregs)
    h1_ref[...] = _bn_rows(jnp.maximum(act_e, act_o))          # (B*P1, HID1)

    # ---- stage 2: conv2 as one im2col matmul per parity; maxpool fused -------
    # Patch row j gathers flattened h1 rows {2j+k} (even) / {2j+1+k} (odd);
    # pooled row j belongs to batch b = j // half1 and is valid iff
    # (j % half1) < P2 (the remaining rows straddle batch boundaries and are
    # masked out of the batch-norm statistics and never read again).
    w2 = w2_ref[...]
    b2 = b2_ref[...]
    pat_e = jnp.concatenate(
        [h1_ref[pl.ds(k, M2, stride=2), :] for k in range(FILTER_W2)], axis=-1)
    pat_o = jnp.concatenate(
        [h1_ref[pl.ds(k + 1, M2, stride=2), :] for k in range(FILTER_W2)], axis=-1)
    a2e = _leaky_relu(jnp.dot(pat_e.astype(cdt), w2,
                              preferred_element_type=jnp.float32) + b2)
    a2o = _leaky_relu(jnp.dot(pat_o.astype(cdt), w2,
                              preferred_element_type=jnp.float32) + b2)
    pool2 = jnp.maximum(a2e, a2o)                               # (M2, HID2)
    row = jax.lax.broadcasted_iota(jnp.int32, (M2, HID2), 0)
    valid = ((row % half1) < P2).astype(jnp.float32)
    h2_ref[...] = _bn_rows(pool2, mask=valid, count=B * P2)     # (M2, HID2)

    # ---- stage 3: conv3 (single output position per batch) + BN + Linear -----
    # Batch b's valid pooled rows sit at j = b*half1 + k, k in [0, P2); since
    # L3 == 1 the im2col patch for batch b is exactly those FILTER_W1 rows.
    pat3 = jnp.concatenate(
        [h2_ref[pl.ds(k, B, stride=half1), :] for k in range(FILTER_W1)], axis=-1)
    a3 = _leaky_relu(jnp.dot(pat3.astype(cdt), w3_ref[...],
                             preferred_element_type=jnp.float32) + b3_ref[...])
    o3 = _bn_rows(a3)                      # (B, HID1); flatten == identity (L3 == 1)
    out_ref[...] = (jnp.dot(o3.astype(cdt), wo_ref[...],
                            preferred_element_type=jnp.float32) + bo_ref[...])


# ---- wrapper ----------------------------------------------------------------
def conv_block_forward(x, params, *, compute_dtype=jnp.float32):
    """x: (B, 1, L) float32, PyTorch NCL layout.

    compute_dtype: dtype of the matmul operands (accumulation is always f32).
    bfloat16 roughly doubles MXU throughput (especially on v5e)."""
    w1, b1, w2, b2, w3, b3, wo, bo = params
    B, cin, L = x.shape
    assert cin == 1, "Conv1d(1, ...) expects a single input channel"

    L1 = L - FILTER_W1 + 1
    P1 = L1 // MAXPOOL_W
    L2 = P1 - FILTER_W2 + 1
    P2 = L2 // MAXPOOL_W
    L3 = P2 - FILTER_W1 + 1
    assert L1 >= MAXPOOL_W and L2 >= MAXPOOL_W, f"input length {L} too short"
    # The PyTorch module flattens to (B, HID1 * L3) and feeds Linear(HID1, ...),
    # which only typechecks when L3 == 1.
    assert L3 == 1, f"input length {L} incompatible with the Linear head (L3={L3})"
    # Flattened even/odd pooling in stage 2 needs each batch's block of pooled
    # rows to start at an even flattened index.
    assert P1 % 2 == 0, f"pooled length after maxpool1 must be even (got {P1})"

    half1 = P1 // 2
    M2 = (B * P1 - FILTER_W2 + 1) // 2      # even/odd conv2 positions (flattened)
    cdt = jnp.dtype(compute_dtype)

    # ---- im2col for conv1 (built wrapper-side); taps padded 6 -> 8 -----------
    xs = x[:, 0, :].astype(jnp.float32)                                    # (B, L)
    patches = jnp.stack([xs[:, k:k + L1] for k in range(FILTER_W1)], -1)   # (B, L1, 6)
    patches = jnp.pad(patches, ((0, 0), (0, 0), (0, TAP_PAD1 - FILTER_W1)))
    pe = patches[:, 0:2 * P1:2, :].reshape(B * P1, TAP_PAD1).astype(cdt)   # even pos.
    po = patches[:, 1:2 * P1:2, :].reshape(B * P1, TAP_PAD1).astype(cdt)   # odd pos.

    # ---- weights: pad / reshape to (contraction, out_channels) ---------------
    w1p = jnp.pad(w1, ((0, TAP_PAD1 - FILTER_W1), (0, 0))).astype(cdt)     # (8, 45)
    w2r = w2.reshape(FILTER_W2 * HID1, HID2).astype(cdt)                   # (225, 64)
    w3r = w3.reshape(FILTER_W1 * HID2, HID1).astype(cdt)                   # (384, 45)
    wor = wo.astype(cdt)                                                   # (45, 64)
    b1f = b1.astype(jnp.float32)
    b2f = b2.astype(jnp.float32)
    b3f = b3.astype(jnp.float32)
    bof = bo.astype(jnp.float32)

    # Advisory cost estimate so XLA can schedule around this tiny custom call.
    flops = 2 * (2 * B * P1 * TAP_PAD1 * HID1
                 + 2 * M2 * FILTER_W2 * HID1 * HID2
                 + B * FILTER_W1 * HID2 * HID1
                 + B * HID1 * OUT_NODES)
    bytes_accessed = (cdt.itemsize * (2 * B * P1 * TAP_PAD1 + TAP_PAD1 * HID1
                                      + FILTER_W2 * HID1 * HID2
                                      + FILTER_W1 * HID2 * HID1
                                      + HID1 * OUT_NODES)
                      + 4 * (2 * HID1 + HID2 + OUT_NODES)    # f32 biases
                      + 4 * B * OUT_NODES)                   # f32 output
    cost = pl.CostEstimate(flops=int(flops),
                           transcendentals=int(2 * HID1 + HID2),
                           bytes_accessed=int(bytes_accessed))

    kernel = functools.partial(_convblock_kernel, B, P1, P2, M2, cdt)
    vmem = pltpu.MemorySpace.VMEM
    out = pl.pallas_call(
        kernel,
        out_shape=jax.ShapeDtypeStruct((B, OUT_NODES), jnp.float32),
        in_specs=[pl.BlockSpec(memory_space=vmem)] * 10,
        out_specs=pl.BlockSpec(memory_space=vmem),
        scratch_shapes=[
            pltpu.VMEM((B * P1, HID1), jnp.float32),   # bn(maxpool1(act(conv1)))
            pltpu.VMEM((M2, HID2), jnp.float32),       # bn(maxpool2(act(conv2)))
        ],
        cost_estimate=cost,
    )(pe, po, w1p, b1f, w2r, b2f, w3r, b3f, wor, bof)
    return out


# ---- deterministic parameter init (synthetic; not a checkpoint) -------------
def init_params(key):
    ks = jax.random.split(key, 8)
    w1 = 0.2 * jax.random.normal(ks[0], (FILTER_W1, HID1), jnp.float32)
    b1 = 0.1 * jax.random.normal(ks[1], (1, HID1), jnp.float32)
    w2 = 0.1 * jax.random.normal(ks[2], (FILTER_W2, HID1, HID2), jnp.float32)
    b2 = 0.1 * jax.random.normal(ks[3], (1, HID2), jnp.float32)
    w3 = 0.1 * jax.random.normal(ks[4], (FILTER_W1, HID2, HID1), jnp.float32)
    b3 = 0.1 * jax.random.normal(ks[5], (1, HID1), jnp.float32)
    wo = 0.1 * jax.random.normal(ks[6], (HID1, OUT_NODES), jnp.float32)
    bo = 0.1 * jax.random.normal(ks[7], (1, OUT_NODES), jnp.float32)
    return (w1, b1, w2, b2, w3, b3, wo, bo)


# ---- pure-JAX reference (for correctness check) -----------------------------
def _bn_ref(v):
    m = jnp.mean(v, axis=(0, 1), keepdims=True)
    var = jnp.mean((v - m) ** 2, axis=(0, 1), keepdims=True)
    return (v - m) * jax.lax.rsqrt(var + BN_EPS)


def ref_forward(x, params):
    w1, b1, w2, b2, w3, b3, wo, bo = params
    hi = jax.lax.Precision.HIGHEST
    B, _, L = x.shape
    xs = x[:, 0, :].astype(jnp.float32)                       # (B, L)

    L1 = L - FILTER_W1 + 1
    P1 = L1 // MAXPOOL_W
    o1 = jnp.zeros((B, L1, HID1), jnp.float32)
    for k in range(FILTER_W1):
        o1 = o1 + xs[:, k:k + L1, None] * w1[k][None, None, :]
    o1 = _leaky_relu(o1 + b1[None])
    o1 = _bn_ref(jnp.maximum(o1[:, 0:2 * P1:2, :], o1[:, 1:2 * P1:2, :]))

    L2 = P1 - FILTER_W2 + 1
    P2 = L2 // MAXPOOL_W
    o2 = jnp.zeros((B, L2, HID2), jnp.float32)
    for k in range(FILTER_W2):
        o2 = o2 + jnp.einsum('blc,cd->bld', o1[:, k:k + L2, :], w2[k], precision=hi)
    o2 = _leaky_relu(o2 + b2[None])
    o2 = _bn_ref(jnp.maximum(o2[:, 0:2 * P2:2, :], o2[:, 1:2 * P2:2, :]))

    L3 = P2 - FILTER_W1 + 1
    o3 = jnp.zeros((B, L3, HID1), jnp.float32)
    for k in range(FILTER_W1):
        o3 = o3 + jnp.einsum('blc,cd->bld', o2[:, k:k + L3, :], w3[k], precision=hi)
    o3 = _bn_ref(_leaky_relu(o3 + b3[None]))

    flat = o3.reshape(B, -1)                                  # (B, HID1) since L3 == 1
    return jnp.dot(flat, wo, precision=hi) + bo


if __name__ == "__main__":
    B, L = 4, 37   # L=37 -> conv/pool chain ends at length 1, as the Linear head requires
    key = jax.random.PRNGKey(0)
    kx, kp = jax.random.split(key)
    x = jax.random.normal(kx, (B, 1, L), jnp.float32)
    params = init_params(kp)

    ref = ref_forward(x, params)

    # f32 matmul operands (default): tight check against the f32 reference.
    out = jax.block_until_ready(conv_block_forward(x, params))
    assert out.shape == (B, OUT_NODES)
    err = jnp.max(jnp.abs(out - ref))
    assert jnp.allclose(out, ref, atol=2e-3, rtol=2e-3), f"f32 max abs err = {err}"

    # bf16 MXU operands with f32 accumulation (the v5e-targeted option): loose check.
    out_bf16 = jax.block_until_ready(
        conv_block_forward(x, params, compute_dtype=jnp.bfloat16))
    err_b = jnp.max(jnp.abs(out_bf16 - ref))
    assert jnp.allclose(out_bf16, ref, atol=5e-2, rtol=5e-2), f"bf16 max abs err = {err_b}"

    print("KERNEL_OK")
</pallas_src>

<mosaic_0001>
module attributes {stable_mosaic.version = 11 : i64} {
  func.func @_convblock_kernel(%arg0: memref<64x8xf32, #tpu.memory_space<vmem>>, %arg1: memref<64x8xf32, #tpu.memory_space<vmem>>, %arg2: memref<8x45xf32, #tpu.memory_space<vmem>>, %arg3: memref<1x45xf32, #tpu.memory_space<vmem>>, %arg4: memref<225x64xf32, #tpu.memory_space<vmem>>, %arg5: memref<1x64xf32, #tpu.memory_space<vmem>>, %arg6: memref<384x45xf32, #tpu.memory_space<vmem>>, %arg7: memref<1x45xf32, #tpu.memory_space<vmem>>, %arg8: memref<45x64xf32, #tpu.memory_space<vmem>>, %arg9: memref<1x64xf32, #tpu.memory_space<vmem>>, %arg10: memref<4x64xf32, #tpu.memory_space<vmem>>, %arg11: memref<64x45xf32, #tpu.memory_space<vmem>>, %arg12: memref<30x64xf32, #tpu.memory_space<vmem>>) attributes {dimension_semantics = [], scalar_prefetch = 0 : i64, scratch_operands = 2 : i64, tpu.core_type = #tpu.core_type<tc>} {
    %c0 = arith.constant 0 : index
    %c0_0 = arith.constant 0 : index
    %0 = vector.load %arg2[%c0, %c0_0] : memref<8x45xf32, #tpu.memory_space<vmem>>, vector<8x45xf32>
    %c0_1 = arith.constant 0 : index
    %c0_2 = arith.constant 0 : index
    %1 = vector.load %arg3[%c0_1, %c0_2] : memref<1x45xf32, #tpu.memory_space<vmem>>, vector<1x45xf32>
    %c0_3 = arith.constant 0 : index
    %c0_4 = arith.constant 0 : index
    %2 = vector.load %arg0[%c0_3, %c0_4] : memref<64x8xf32, #tpu.memory_space<vmem>>, vector<64x8xf32>
    %cst = arith.constant dense<0.000000e+00> : vector<64x45xf32>
    %3 = tpu.matmul %2, %0, %cst {dimension_numbers = #tpu.dot_dimension_numbers<[1], [0], [0], [1], [0, 0, 1, 1], [], []>} : vector<64x8xf32>, vector<8x45xf32>, vector<64x45xf32> -> vector<64x45xf32>
    %4 = vector.broadcast %1 : vector<1x45xf32> to vector<64x45xf32>
    %5 = arith.addf %3, %4 : vector<64x45xf32>
    %cst_5 = arith.constant 0.000000e+00 : f32
    %6 = vector.broadcast %cst_5 : f32 to vector<64x45xf32>
    %7 = arith.cmpf ogt, %5, %6 : vector<64x45xf32>
    %cst_6 = arith.constant 0.00999999977 : f32
    %8 = vector.broadcast %cst_6 : f32 to vector<64x45xf32>
    %9 = arith.mulf %8, %5 : vector<64x45xf32>
    %10 = arith.select %7, %5, %9 : vector<64x45xi1>, vector<64x45xf32>
    %c0_7 = arith.constant 0 : index
    %c0_8 = arith.constant 0 : index
    %11 = vector.load %arg1[%c0_7, %c0_8] : memref<64x8xf32, #tpu.memory_space<vmem>>, vector<64x8xf32>
    %cst_9 = arith.constant dense<0.000000e+00> : vector<64x45xf32>
    %12 = tpu.matmul %11, %0, %cst_9 {dimension_numbers = #tpu.dot_dimension_numbers<[1], [0], [0], [1], [0, 0, 1, 1], [], []>} : vector<64x8xf32>, vector<8x45xf32>, vector<64x45xf32> -> vector<64x45xf32>
    %13 = vector.broadcast %1 : vector<1x45xf32> to vector<64x45xf32>
    %14 = arith.addf %12, %13 : vector<64x45xf32>
    %cst_10 = arith.constant 0.000000e+00 : f32
    %15 = vector.broadcast %cst_10 : f32 to vector<64x45xf32>
    %16 = arith.cmpf ogt, %14, %15 : vector<64x45xf32>
    %cst_11 = arith.constant 0.00999999977 : f32
    %17 = vector.broadcast %cst_11 : f32 to vector<64x45xf32>
    %18 = arith.mulf %17, %14 : vector<64x45xf32>
    %19 = arith.select %16, %14, %18 : vector<64x45xi1>, vector<64x45xf32>
    %20 = arith.maximumf %10, %19 : vector<64x45xf32>
    %cst_12 = arith.constant dense<0.000000e+00> : vector<45xf32>
    %21 = vector.multi_reduction <add>, %20, %cst_12 [0] : vector<64x45xf32> to vector<45xf32>
    %22 = vector.shape_cast %21 : vector<45xf32> to vector<1x45xf32>
    %23 = arith.mulf %20, %20 : vector<64x45xf32>
    %cst_13 = arith.constant dense<0.000000e+00> : vector<45xf32>
    %24 = vector.multi_reduction <add>, %23, %cst_13 [0] : vector<64x45xf32> to vector<45xf32>
    %25 = vector.shape_cast %24 : vector<45xf32> to vector<1x45xf32>
    %cst_14 = arith.constant 6.400000e+01 : f32
    %26 = vector.broadcast %cst_14 : f32 to vector<1x45xf32>
    %27 = arith.divf %22, %26 : vector<1x45xf32>
    %cst_15 = arith.constant 6.400000e+01 : f32
    %28 = vector.broadcast %cst_15 : f32 to vector<1x45xf32>
    %29 = arith.divf %25, %28 : vector<1x45xf32>
    %30 = arith.mulf %27, %27 : vector<1x45xf32>
    %31 = arith.subf %29, %30 : vector<1x45xf32>
    %32 = vector.broadcast %27 : vector<1x45xf32> to vector<64x45xf32>
    %33 = arith.subf %20, %32 : vector<64x45xf32>
    %cst_16 = arith.constant 9.99999974E-6 : f32
    %34 = vector.broadcast %cst_16 : f32 to vector<1x45xf32>
    %35 = arith.addf %31, %34 : vector<1x45xf32>
    %36 = math.rsqrt %35 : vector<1x45xf32>
    %37 = vector.broadcast %36 : vector<1x45xf32> to vector<64x45xf32>
    %38 = arith.mulf %33, %37 : vector<64x45xf32>
    %c0_17 = arith.constant 0 : index
    %c0_18 = arith.constant 0 : index
    %39 = vector.load %arg11[%c0_17, %c0_18] : memref<64x45xf32, #tpu.memory_space<vmem>>, vector<64x45xf32>
    tpu.vector_store %arg11[%c0_17, %c0_18], %38 {strides = array<i32>} : memref<64x45xf32, #tpu.memory_space<vmem>>, vector<64x45xf32>,
    %c0_19 = arith.constant 0 : index
    %c0_20 = arith.constant 0 : index
    %40 = vector.load %arg4[%c0_19, %c0_20] : memref<225x64xf32, #tpu.memory_space<vmem>>, vector<225x64xf32>
    %c0_21 = arith.constant 0 : index
    %c0_22 = arith.constant 0 : index
    %41 = vector.load %arg5[%c0_21, %c0_22] : memref<1x64xf32, #tpu.memory_space<vmem>>, vector<1x64xf32>
    %c0_23 = arith.constant 0 : index
    %c0_24 = arith.constant 0 : index
    %42 = tpu.strided_load %arg11[%c0_23, %c0_24] {strides = array<i32: 2, 1>} : memref<64x45xf32, #tpu.memory_space<vmem>>, vector<30x45xf32>
    %c1 = arith.constant 1 : index
    %c0_25 = arith.constant 0 : index
    %43 = tpu.strided_load %arg11[%c1, %c0_25] {strides = array<i32: 2, 1>} : memref<64x45xf32, #tpu.memory_space<vmem>>, vector<30x45xf32>
    %c2 = arith.constant 2 : index
    %c0_26 = arith.constant 0 : index
    %44 = tpu.strided_load %arg11[%c2, %c0_26] {strides = array<i32: 2, 1>} : memref<64x45xf32, #tpu.memory_space<vmem>>, vector<30x45xf32>
    %c3 = arith.constant 3 : index
    %c0_27 = arith.constant 0 : index
    %45 = tpu.strided_load %arg11[%c3, %c0_27] {strides = array<i32: 2, 1>} : memref<64x45xf32, #tpu.memory_space<vmem>>, vector<30x45xf32>
    %c4 = arith.constant 4 : index
    %c0_28 = arith.constant 0 : index
    %46 = tpu.strided_load %arg11[%c4, %c0_28] {strides = array<i32: 2, 1>} : memref<64x45xf32, #tpu.memory_space<vmem>>, vector<30x45xf32>
    %47 = tpu.concatenate %42, %43, %44, %45, %46 in 1 : vector<30x45xf32>, vector<30x45xf32>, vector<30x45xf32>, vector<30x45xf32>, vector<30x45xf32> -> vector<30x225xf32>
    %c1_29 = arith.constant 1 : index
    %c0_30 = arith.constant 0 : index
    %48 = tpu.strided_load %arg11[%c1_29, %c0_30] {strides = array<i32: 2, 1>} : memref<64x45xf32, #tpu.memory_space<vmem>>, vector<30x45xf32>
    %c2_31 = arith.constant 2 : index
    %c0_32 = arith.constant 0 : index
    %49 = tpu.strided_load %arg11[%c2_31, %c0_32] {strides = array<i32: 2, 1>} : memref<64x45xf32, #tpu.memory_space<vmem>>, vector<30x45xf32>
    %c3_33 = arith.constant 3 : index
    %c0_34 = arith.constant 0 : index
    %50 = tpu.strided_load %arg11[%c3_33, %c0_34] {strides = array<i32: 2, 1>} : memref<64x45xf32, #tpu.memory_space<vmem>>, vector<30x45xf32>
    %c4_35 = arith.constant 4 : index
    %c0_36 = arith.constant 0 : index
    %51 = tpu.strided_load %arg11[%c4_35, %c0_36] {strides = array<i32: 2, 1>} : memref<64x45xf32, #tpu.memory_space<vmem>>, vector<30x45xf32>
    %c5 = arith.constant 5 : index
    %c0_37 = arith.constant 0 : index
    %52 = tpu.strided_load %arg11[%c5, %c0_37] {strides = array<i32: 2, 1>} : memref<64x45xf32, #tpu.memory_space<vmem>>, vector<30x45xf32>
    %53 = tpu.concatenate %48, %49, %50, %51, %52 in 1 : vector<30x45xf32>, vector<30x45xf32>, vector<30x45xf32>, vector<30x45xf32>, vector<30x45xf32> -> vector<30x225xf32>
    %cst_38 = arith.constant dense<0.000000e+00> : vector<30x64xf32>
    %54 = tpu.matmul %47, %40, %cst_38 {dimension_numbers = #tpu.dot_dimension_numbers<[1], [0], [0], [1], [0, 0, 1, 1], [], []>} : vector<30x225xf32>, vector<225x64xf32>, vector<30x64xf32> -> vector<30x64xf32>
    %55 = vector.broadcast %41 : vector<1x64xf32> to vector<30x64xf32>
    %56 = arith.addf %54, %55 : vector<30x64xf32>
    %cst_39 = arith.constant 0.000000e+00 : f32
    %57 = vector.broadcast %cst_39 : f32 to vector<30x64xf32>
    %58 = arith.cmpf ogt, %56, %57 : vector<30x64xf32>
    %cst_40 = arith.constant 0.00999999977 : f32
    %59 = vector.broadcast %cst_40 : f32 to vector<30x64xf32>
    %60 = arith.mulf %59, %56 : vector<30x64xf32>
    %61 = arith.select %58, %56, %60 : vector<30x64xi1>, vector<30x64xf32>
    %cst_41 = arith.constant dense<0.000000e+00> : vector<30x64xf32>
    %62 = tpu.matmul %53, %40, %cst_41 {dimension_numbers = #tpu.dot_dimension_numbers<[1], [0], [0], [1], [0, 0, 1, 1], [], []>} : vector<30x225xf32>, vector<225x64xf32>, vector<30x64xf32> -> vector<30x64xf32>
    %63 = vector.broadcast %41 : vector<1x64xf32> to vector<30x64xf32>
    %64 = arith.addf %62, %63 : vector<30x64xf32>
    %cst_42 = arith.constant 0.000000e+00 : f32
    %65 = vector.broadcast %cst_42 : f32 to vector<30x64xf32>
    %66 = arith.cmpf ogt, %64, %65 : vector<30x64xf32>
    %cst_43 = arith.constant 0.00999999977 : f32
    %67 = vector.broadcast %cst_43 : f32 to vector<30x64xf32>
    %68 = arith.mulf %67, %64 : vector<30x64xf32>
    %69 = arith.select %66, %64, %68 : vector<30x64xi1>, vector<30x64xf32>
    %70 = arith.maximumf %61, %69 : vector<30x64xf32>
    %71 = tpu.iota {dimensions = array<i32: 0>} : vector<30x64xi32>
    %c8_i32 = arith.constant 8 : i32
    %c0_i32 = arith.constant 0 : i32
    %72 = arith.cmpi eq, %c8_i32, %c0_i32 : i32
    %c1_i32 = arith.constant 1 : i32
    %73 = arith.select %72, %c1_i32, %c8_i32 : i32
    %74 = vector.broadcast %73 : i32 to vector<30x64xi32>
    %75 = arith.remsi %71, %74 : vector<30x64xi32>
    %c0_i32_44 = arith.constant 0 : i32
    %76 = vector.broadcast %c0_i32_44 : i32 to vector<30x64xi32>
    %77 = arith.cmpi ne, %75, %76 : vector<30x64xi32>
    %c0_i32_45 = arith.constant 0 : i32
    %78 = vector.broadcast %c0_i32_45 : i32 to vector<30x64xi32>
    %79 = arith.cmpi slt, %75, %78 : vector<30x64xi32>
    %c0_i32_46 = arith.constant 0 : i32
    %80 = arith.cmpi slt, %73, %c0_i32_46 : i32
    %81 = vector.broadcast %80 : i1 to vector<30x64xi1>
    %82 = vector.broadcast %81 : vector<30x64xi1> to vector<30x64xi1>
    %83 = arith.xori %79, %82 : vector<30x64xi1>
    %84 = arith.andi %83, %77 : vector<30x64xi1>
    %85 = vector.broadcast %73 : i32 to vector<30x64xi32>
    %86 = arith.addi %75, %85 : vector<30x64xi32>
    %87 = arith.select %84, %86, %75 : vector<30x64xi1>, vector<30x64xi32>
    %c6_i32 = arith.constant 6 : i32
    %88 = vector.broadcast %c6_i32 : i32 to vector<30x64xi32>
    %89 = arith.cmpi slt, %87, %88 : vector<30x64xi32>
    %90 = arith.extui %89 : vector<30x64xi1> to vector<30x64xi32>
    %91 = arith.sitofp %90 : vector<30x64xi32> to vector<30x64xf32>
    %92 = arith.mulf %70, %91 : vector<30x64xf32>
    %cst_47 = arith.constant dense<0.000000e+00> : vector<64xf32>
    %93 = vector.multi_reduction <add>, %92, %cst_47 [0] : vector<30x64xf32> to vector<64xf32>
    %94 = vector.shape_cast %93 : vector<64xf32> to vector<1x64xf32>
    %95 = arith.mulf %70, %70 : vector<30x64xf32>
    %96 = arith.mulf %95, %91 : vector<30x64xf32>
    %cst_48 = arith.constant dense<0.000000e+00> : vector<64xf32>
    %97 = vector.multi_reduction <add>, %96, %cst_48 [0] : vector<30x64xf32> to vector<64xf32>
    %98 = vector.shape_cast %97 : vector<64xf32> to vector<1x64xf32>
    %cst_49 = arith.constant 2.400000e+01 : f32
    %99 = vector.broadcast %cst_49 : f32 to vector<1x64xf32>
    %100 = arith.divf %94, %99 : vector<1x64xf32>
    %cst_50 = arith.constant 2.400000e+01 : f32
    %101 = vector.broadcast %cst_50 : f32 to vector<1x64xf32>
    %102 = arith.divf %98, %101 : vector<1x64xf32>
    %103 = arith.mulf %100, %100 : vector<1x64xf32>
    %104 = arith.subf %102, %103 : vector<1x64xf32>
    %105 = vector.broadcast %100 : vector<1x64xf32> to vector<30x64xf32>
    %106 = arith.subf %70, %105 : vector<30x64xf32>
    %cst_51 = arith.constant 9.99999974E-6 : f32
    %107 = vector.broadcast %cst_51 : f32 to vector<1x64xf32>
    %108 = arith.addf %104, %107 : vector<1x64xf32>
    %109 = math.rsqrt %108 : vector<1x64xf32>
    %110 = vector.broadcast %109 : vector<1x64xf32> to vector<30x64xf32>
    %111 = arith.mulf %106, %110 : vector<30x64xf32>
    %c0_52 = arith.constant 0 : index
    %c0_53 = arith.constant 0 : index
    %112 = vector.load %arg12[%c0_52, %c0_53] : memref<30x64xf32, #tpu.memory_space<vmem>>, vector<30x64xf32>
    tpu.vector_store %arg12[%c0_52, %c0_53], %111 {strides = array<i32>} : memref<30x64xf32, #tpu.memory_space<vmem>>, vector<30x64xf32>,
    %c0_54 = arith.constant 0 : index
    %c0_55 = arith.constant 0 : index
    %113 = tpu.strided_load %arg12[%c0_54, %c0_55] {strides = array<i32: 8, 1>} : memref<30x64xf32, #tpu.memory_space<vmem>>, vector<4x64xf32>
    %c1_56 = arith.constant 1 : index
    %c0_57 = arith.constant 0 : index
    %114 = tpu.strided_load %arg12[%c1_56, %c0_57] {strides = array<i32: 8, 1>} : memref<30x64xf32, #tpu.memory_space<vmem>>, vector<4x64xf32>
    %c2_58 = arith.constant 2 : index
    %c0_59 = arith.constant 0 : index
    %115 = tpu.strided_load %arg12[%c2_58, %c0_59] {strides = array<i32: 8, 1>} : memref<30x64xf32, #tpu.memory_space<vmem>>, vector<4x64xf32>
    %c3_60 = arith.constant 3 : index
    %c0_61 = arith.constant 0 : index
    %116 = tpu.strided_load %arg12[%c3_60, %c0_61] {strides = array<i32: 8, 1>} : memref<30x64xf32, #tpu.memory_space<vmem>>, vector<4x64xf32>
    %c4_62 = arith.constant 4 : index
    %c0_63 = arith.constant 0 : index
    %117 = tpu.strided_load %arg12[%c4_62, %c0_63] {strides = array<i32: 8, 1>} : memref<30x64xf32, #tpu.memory_space<vmem>>, vector<4x64xf32>
    %c5_64 = arith.constant 5 : index
    %c0_65 = arith.constant 0 : index
    %118 = tpu.strided_load %arg12[%c5_64, %c0_65] {strides = array<i32: 8, 1>} : memref<30x64xf32, #tpu.memory_space<vmem>>, vector<4x64xf32>
    %119 = tpu.concatenate %113, %114, %115, %116, %117, %118 in 1 : vector<4x64xf32>, vector<4x64xf32>, vector<4x64xf32>, vector<4x64xf32>, vector<4x64xf32>, vector<4x64xf32> -> vector<4x384xf32>
    %c0_66 = arith.constant 0 : index
    %c0_67 = arith.constant 0 : index
    %120 = vector.load %arg6[%c0_66, %c0_67] : memref<384x45xf32, #tpu.memory_space<vmem>>, vector<384x45xf32>
    %cst_68 = arith.constant dense<0.000000e+00> : vector<4x45xf32>
    %121 = tpu.matmul %119, %120, %cst_68 {dimension_numbers = #tpu.dot_dimension_numbers<[1], [0], [0], [1], [0, 0, 1, 1], [], []>} : vector<4x384xf32>, vector<384x45xf32>, vector<4x45xf32> -> vector<4x45xf32>
    %c0_69 = arith.constant 0 : index
    %c0_70 = arith.constant 0 : index
    %122 = vector.load %arg7[%c0_69, %c0_70] : memref<1x45xf32, #tpu.memory_space<vmem>>, vector<1x45xf32>
    %123 = vector.broadcast %122 : vector<1x45xf32> to vector<4x45xf32>
    %124 = arith.addf %121, %123 : vector<4x45xf32>
    %cst_71 = arith.constant 0.000000e+00 : f32
    %125 = vector.broadcast %cst_71 : f32 to vector<4x45xf32>
    %126 = arith.cmpf ogt, %124, %125 : vector<4x45xf32>
    %cst_72 = arith.constant 0.00999999977 : f32
    %127 = vector.broadcast %cst_72 : f32 to vector<4x45xf32>
    %128 = arith.mulf %127, %124 : vector<4x45xf32>
    %129 = arith.select %126, %124, %128 : vector<4x45xi1>, vector<4x45xf32>
    %cst_73 = arith.constant dense<0.000000e+00> : vector<45xf32>
    %130 = vector.multi_reduction <add>, %129, %cst_73 [0] : vector<4x45xf32> to vector<45xf32>
    %131 = vector.shape_cast %130 : vector<45xf32> to vector<1x45xf32>
    %132 = arith.mulf %129, %129 : vector<4x45xf32>
    %cst_74 = arith.constant dense<0.000000e+00> : vector<45xf32>
    %133 = vector.multi_reduction <add>, %132, %cst_74 [0] : vector<4x45xf32> to vector<45xf32>
    %134 = vector.shape_cast %133 : vector<45xf32> to vector<1x45xf32>
    %cst_75 = arith.constant 4.000000e+00 : f32
    %135 = vector.broadcast %cst_75 : f32 to vector<1x45xf32>
    %136 = arith.divf %131, %135 : vector<1x45xf32>
    %cst_76 = arith.constant 4.000000e+00 : f32
    %137 = vector.broadcast %cst_76 : f32 to vector<1x45xf32>
    %138 = arith.divf %134, %137 : vector<1x45xf32>
    %139 = arith.mulf %136, %136 : vector<1x45xf32>
    %140 = arith.subf %138, %139 : vector<1x45xf32>
    %141 = vector.broadcast %136 : vector<1x45xf32> to vector<4x45xf32>
    %142 = arith.subf %129, %141 : vector<4x45xf32>
    %cst_77 = arith.constant 9.99999974E-6 : f32
    %143 = vector.broadcast %cst_77 : f32 to vector<1x45xf32>
    %144 = arith.addf %140, %143 : vector<1x45xf32>
    %145 = math.rsqrt %144 : vector<1x45xf32>
    %146 = vector.broadcast %145 : vector<1x45xf32> to vector<4x45xf32>
    %147 = arith.mulf %142, %146 : vector<4x45xf32>
    %c0_78 = arith.constant 0 : index
    %c0_79 = arith.constant 0 : index
    %148 = vector.load %arg8[%c0_78, %c0_79] : memref<45x64xf32, #tpu.memory_space<vmem>>, vector<45x64xf32>
    %cst_80 = arith.constant dense<0.000000e+00> : vector<4x64xf32>
    %149 = tpu.matmul %147, %148, %cst_80 {dimension_numbers = #tpu.dot_dimension_numbers<[1], [0], [0], [1], [0, 0, 1, 1], [], []>} : vector<4x45xf32>, vector<45x64xf32>, vector<4x64xf32> -> vector<4x64xf32>
    %c0_81 = arith.constant 0 : index
    %c0_82 = arith.constant 0 : index
    %150 = vector.load %arg9[%c0_81, %c0_82] : memref<1x64xf32, #tpu.memory_space<vmem>>, vector<1x64xf32>
    %151 = vector.broadcast %150 : vector<1x64xf32> to vector<4x64xf32>
    %152 = arith.addf %149, %151 : vector<4x64xf32>
    %c0_83 = arith.constant 0 : index
    %c0_84 = arith.constant 0 : index
    %153 = vector.load %arg10[%c0_83, %c0_84] : memref<4x64xf32, #tpu.memory_space<vmem>>, vector<4x64xf32>
    tpu.vector_store %arg10[%c0_83, %c0_84], %152 {strides = array<i32>} : memref<4x64xf32, #tpu.memory_space<vmem>>, vector<4x64xf32>,
    return
  }
}

</mosaic_0001>

<llo_original>
// kernel: tpu_custom_call.1
$region0: #{tpu_custom_call.1}
  #allocation0 [shape = 'u32[]', space=smem, size = 0x4, offset = 0x4, fixed_abs, tag = 'smem constant byte address 0x4 - core index']
  #allocation1 [shape = 'u32[144,128]{1,0:T(1,128)}', space=vmem, size = 0x12000, scoped, tag = 'internal scratch']
  #allocation2 [shape = 'f32[64,45]{1,0:T(8,128)}', space=vmem, size = 0x8000, scoped, tag = 'scratch operand']
  #allocation3 [shape = 'f32[30,64]{1,0:T(8,128)}', space=vmem, size = 0x4000, scoped, tag = 'scratch operand']
  %s0 = inlined_call_operand.vmem [shape: f32[64,8], index: 0, kind: input, shape index: {}]
  %s1 = inlined_call_operand.vmem [shape: f32[64,8], index: 1, kind: input, shape index: {}]
  %s2 = inlined_call_operand.vmem [shape: f32[8,45], index: 2, kind: input, shape index: {}]
  %s3 = inlined_call_operand.vmem [shape: f32[1,45], index: 3, kind: input, shape index: {}]
  %s4 = inlined_call_operand.vmem [shape: f32[225,64], index: 4, kind: input, shape index: {}]
  %s5 = inlined_call_operand.vmem [shape: f32[1,64], index: 5, kind: input, shape index: {}]
  %s6 = inlined_call_operand.vmem [shape: f32[384,45], index: 6, kind: input, shape index: {}]
  %s7 = inlined_call_operand.vmem [shape: f32[1,45], index: 7, kind: input, shape index: {}]
  %s8 = inlined_call_operand.vmem [shape: f32[45,64], index: 8, kind: input, shape index: {}]
  %s9 = inlined_call_operand.vmem [shape: f32[1,64], index: 9, kind: input, shape index: {}]
  %s10 = inlined_call_operand.hbm [shape: f32[4,64], index: 10, kind: output, shape index: {}]
  %s11 = sld [smem:[#allocation0]]
  $region50: #{tpu_custom_call.1} parent=0
    _
  %s13 = ssub.s32 1, %s11
  %s14 = scalar_select 0, %s13, %s11
  $region1: #{tpu_custom_call.1} parent=0
    #allocation4 [shape = 'u8[2048]{0}', space=vmem, size = 0x800, scoped, tag = 'output window, operand 0, single buffered']
    #allocation5 [shape = 's32[1]{0}', space=sflag, size = 0x4, scoped, tag = 'scoped memory for tpu_custom_call.1']
    %15 = vsyncpa [#allocation5], 0
    // Predicated region
    $region2: #{tpu_custom_call.1} parent=1 // pred_check
      _
    $region3: #{tpu_custom_call.1} parent=1 // pred_check_branch
      %17 = sbr.rel (0) target = $region5
    $region4: #{tpu_custom_call.1} parent=1 // pred_region
      _
    $region5: #{tpu_custom_call.1} parent=1 // pred_fallthru
      _
    // Predicated region
    $region6: #{tpu_custom_call.1} parent=1 // pred_check
      _
    $region7: #{tpu_custom_call.1} parent=1 // pred_check_branch
      %19 = sbr.rel (0) target = $region9
    $region8: #{tpu_custom_call.1} parent=1 // pred_region
      _
    $region9: #{tpu_custom_call.1} parent=1 // pred_fallthru
      _
    // Predicated region
    $region10: #{tpu_custom_call.1} parent=1 // pred_check
      _
    $region11: #{tpu_custom_call.1} parent=1 // pred_check_branch
      %21 = sbr.rel (0) target = $region13
    $region12: #{tpu_custom_call.1} parent=1 // pred_region
      _
    $region13: #{tpu_custom_call.1} parent=1 // pred_fallthru
      _
    // Predicated region
    $region14: #{tpu_custom_call.1} parent=1 // pred_check
      _
    $region15: #{tpu_custom_call.1} parent=1 // pred_check_branch
      %23 = sbr.rel (0) target = $region17
    $region16: #{tpu_custom_call.1} parent=1 // pred_region
      _
    $region17: #{tpu_custom_call.1} parent=1 // pred_fallthru
      _
    // Predicated region
    $region18: #{tpu_custom_call.1} parent=1 // pred_check
      _
    $region19: #{tpu_custom_call.1} parent=1 // pred_check_branch
      %25 = sbr.rel (0) target = $region21
    $region20: #{tpu_custom_call.1} parent=1 // pred_region
      _
    $region21: #{tpu_custom_call.1} parent=1 // pred_fallthru
      _
    // Predicated region
    $region22: #{tpu_custom_call.1} parent=1 // pred_check
      _
    $region23: #{tpu_custom_call.1} parent=1 // pred_check_branch
      %27 = sbr.rel (0) target = $region25
    $region24: #{tpu_custom_call.1} parent=1 // pred_region
      _
    $region25: #{tpu_custom_call.1} parent=1 // pred_fallthru
      _
    // Predicated region
    $region26: #{tpu_custom_call.1} parent=1 // pred_check
      _
    $region27: #{tpu_custom_call.1} parent=1 // pred_check_branch
      %29 = sbr.rel (0) target = $region29
    $region28: #{tpu_custom_call.1} parent=1 // pred_region
      _
    $region29: #{tpu_custom_call.1} parent=1 // pred_fallthru
      _
    // Predicated region
    $region30: #{tpu_custom_call.1} parent=1 // pred_check
      _
    $region31: #{tpu_custom_call.1} parent=1 // pred_check_branch
      %31 = sbr.rel (0) target = $region33
    $region32: #{tpu_custom_call.1} parent=1 // pred_region
      _
    $region33: #{tpu_custom_call.1} parent=1 // pred_fallthru
      _
    // Predicated region
    $region34: #{tpu_custom_call.1} parent=1 // pred_check
      _
    $region35: #{tpu_custom_call.1} parent=1 // pred_check_branch
      %33 = sbr.rel (0) target = $region37
    $region36: #{tpu_custom_call.1} parent=1 // pred_region
      _
    $region37: #{tpu_custom_call.1} parent=1 // pred_fallthru
      _
    // Predicated region
    $region38: #{tpu_custom_call.1} parent=1 // pred_check
      _
    $region39: #{tpu_custom_call.1} parent=1 // pred_check_branch
      %35 = sbr.rel (0) target = $region41
    $region40: #{tpu_custom_call.1} parent=1 // pred_region
      _
    $region41: #{tpu_custom_call.1} parent=1 // pred_fallthru
      _
    %v36 = vld [vmem:[%s2] sm:$0xff]
    %v37 = vld [vmem:[%s3] sm:$0x1]
    %v38 = vld [vmem:[%s0] sm:$0xff]
    %v39 = vld [vmem:[%s0 + $0x8] sm:$0xff]
    %v40 = vld [vmem:[%s0 + $0x10] sm:$0xff]
    %v41 = vld [vmem:[%s0 + $0x18] sm:$0xff]
    %v42 = vld [vmem:[%s0 + $0x20] sm:$0xff]
    %v43 = vld [vmem:[%s0 + $0x28] sm:$0xff]
    %v44 = vld [vmem:[%s0 + $0x30] sm:$0xff]
    %v45 = vld [vmem:[%s0 + $0x38] sm:$0xff]
    %v47 = vlaneseq
    %v48 = vshrl.u32 %v47, 7
    %v49 = vsub.s32 0, %v48
    %v50 = vrot.slane %v37, %v49
    %vm52 = vcmask 64512
    %v54 = vsel %vm52, %v38, 0
    %v57 = vsel %vm52, %v39, 0
    %v60 = vsel %vm52, %v40, 0
    %v63 = vsel %vm52, %v41, 0
    %v66 = vsel %vm52, %v42, 0
    %v69 = vsel %vm52, %v43, 0
    %v72 = vsel %vm52, %v44, 0
    %v75 = vsel %vm52, %v45, 0
    %77 = vmatprep.subr.mxu0 0.0
    %78 = vmatpush1.msra.mxu0 %v36
    %79 = vmatprep.subr.mxu0 0.0
    %80 = vmatpush1.msra.mxu0 0.0
    %81 = vmatprep.subr.mxu0 0.0
    %82 = vmatpush1.msra.mxu0 0.0
    %83 = vmatprep.subr.mxu0 0.0
    %84 = vmatpush1.msra.mxu0 0.0
    %85 = vmatprep.subr.mxu0 0.0
    %86 = vmatpush1.msra.mxu0 0.0
    %87 = vmatprep.subr.mxu0 0.0
    %88 = vmatpush1.msra.mxu0 0.0
    %89 = vmatprep.subr.mxu0 0.0
    %90 = vmatpush1.msra.mxu0 0.0
    %91 = vmatprep.subr.mxu0 0.0
    %92 = vmatpush1.msra.mxu0 0.0
    %93 = vmatprep.subr.mxu0 0.0
    %94 = vmatpush1.msra.mxu0 0.0
    %95 = vmatprep.subr.mxu0 0.0
    %96 = vmatpush1.msra.mxu0 0.0
    %97 = vmatprep.subr.mxu0 0.0
    %98 = vmatpush1.msra.mxu0 0.0
    %99 = vmatprep.subr.mxu0 0.0
    %100 = vmatpush1.msra.mxu0 0.0
    %101 = vmatprep.subr.mxu0 0.0
    %102 = vmatpush1.msra.mxu0 0.0
    %103 = vmatprep.subr.mxu0 0.0
    %104 = vmatpush1.msra.mxu0 0.0
    %105 = vmatprep.subr.mxu0 0.0
    %106 = vmatpush1.msra.mxu0 0.0
    %107 = vmatprep.subr.mxu0 0.0
    %108 = vmatpush1.msra.mxu0 0.0
    %109 = vmatprep.subr.mxu0 0.0
    %110 = vmatpush1.msra.mxu0 0.0
    %111 = vmatprep.subr.mxu0 0.0
    %112 = vmatpush1.msra.mxu0 0.0
    %113 = vmatprep.subr.mxu0 0.0
    %114 = vmatpush1.msra.mxu0 0.0
    %115 = vmatprep.subr.mxu0 0.0
    %116 = vmatpush1.msra.mxu0 0.0
    %117 = vmatprep.subr.mxu0 0.0
    %118 = vmatpush1.msra.mxu0 0.0
    %119 = vmatprep.subr.mxu0 0.0
    %120 = vmatpush1.msra.mxu0 0.0
    %121 = vmatprep.subr.mxu0 0.0
    %122 = vmatpush1.msra.mxu0 0.0
    %123 = vmatprep.subr.mxu0 0.0
    %124 = vmatpush1.msra.mxu0 0.0
    %125 = vmatprep.subr.mxu0 0.0
    %126 = vmatpush1.msra.mxu0 0.0
    %127 = vmatprep.subr.mxu0 0.0
    %128 = vmatpush1.msra.mxu0 0.0
    %129 = vmatprep.subr.mxu0 0.0
    %130 = vmatpush1.msra.mxu0 0.0
    %131 = vmatprep.subr.mxu0 0.0
    %132 = vmatpush1.msra.mxu0 0.0
    %133 = vmatprep.subr.mxu0 0.0
    %134 = vmatpush1.msra.mxu0 0.0
    %135 = vmatprep.subr.mxu0 0.0
    %136 = vmatpush1.msra.mxu0 0.0
    %137 = vmatprep.subr.mxu0 0.0
    %138 = vmatpush1.msra.mxu0 0.0
    %139 = vmatprep.subr.mxu0 0.0
    %140 = vmatpush1.msra.mxu0 0.0
    %141 = vmatprep.mubr.f32.mxu0 0.0
    %142 = vmatmul.mubr.f32.gmra.mrb[0].mxu0 %v54
    %v143 = vpop.f32.mrb[0].mxu0
    %v144 = vadd.f32 %v50, %v143
    %v145 = vpop.f32.mrb[0].mxu0
    %146 = vmatprep.mubr.f32.mxu0 0.0
    %147 = vmatmul.mubr.f32.gmra.mrb[0].mxu0 %v57
    %v148 = vpop.f32.mrb[0].mxu0
    %v149 = vadd.f32 %v50, %v148
    %v150 = vpop.f32.mrb[0].mxu0
    %151 = vmatprep.mubr.f32.mxu0 0.0
    %152 = vmatmul.mubr.f32.gmra.mrb[0].mxu0 %v60
    %v153 = vpop.f32.mrb[0].mxu0
    %v154 = vadd.f32 %v50, %v153
    %v155 = vpop.f32.mrb[0].mxu0
    %156 = vmatprep.mubr.f32.mxu0 0.0
    %157 = vmatmul.mubr.f32.gmra.mrb[0].mxu0 %v63
    %v158 = vpop.f32.mrb[0].mxu0
    %v159 = vadd.f32 %v50, %v158
    %v160 = vpop.f32.mrb[0].mxu0
    %161 = vmatprep.mubr.f32.mxu0 0.0
    %162 = vmatmul.mubr.f32.gmra.mrb[0].mxu0 %v66
    %v163 = vpop.f32.mrb[0].mxu0
    %v164 = vadd.f32 %v50, %v163
    %v165 = vpop.f32.mrb[0].mxu0
    %166 = vmatprep.mubr.f32.mxu0 0.0
    %167 = vmatmul.mubr.f32.gmra.mrb[0].mxu0 %v69
    %v168 = vpop.f32.mrb[0].mxu0
    %v169 = vadd.f32 %v50, %v168
    %v170 = vpop.f32.mrb[0].mxu0
    %171 = vmatprep.mubr.f32.mxu0 0.0
    %172 = vmatmul.mubr.f32.gmra.mrb[0].mxu0 %v72
    %v173 = vpop.f32.mrb[0].mxu0
    %v174 = vadd.f32 %v50, %v173
    %v175 = vpop.f32.mrb[0].mxu0
    %176 = vmatprep.mubr.f32.mxu0 0.0
    %177 = vmatmul.mubr.f32.gmra.mrb[0].mxu0 %v75
    %v178 = vpop.f32.mrb[0].mxu0
    %v179 = vadd.f32 %v50, %v178
    %v180 = vpop.f32.mrb[0].mxu0
    %181 = vdwg.mxu0
    %vm182 = vcmp.gt.f32.partialorder %v144, 0.0
    %vm183 = vcmp.gt.f32.partialorder %v149, 0.0
    %vm184 = vcmp.gt.f32.partialorder %v154, 0.0
    %vm185 = vcmp.gt.f32.partialorder %v159, 0.0
    %vm186 = vcmp.gt.f32.partialorder %v164, 0.0
    %vm187 = vcmp.gt.f32.partialorder %v169, 0.0
    %vm188 = vcmp.gt.f32.partialorder %v174, 0.0
    %vm189 = vcmp.gt.f32.partialorder %v179, 0.0
    %v190 = vmul.f32 %v144, 0.01
    %v191 = vmul.f32 %v149, 0.01
    %v192 = vmul.f32 %v154, 0.01
    %v193 = vmul.f32 %v159, 0.01
    %v194 = vmul.f32 %v164, 0.01
    %v195 = vmul.f32 %v169, 0.01
    %v196 = vmul.f32 %v174, 0.01
    %v197 = vmul.f32 %v179, 0.01
    %v198 = vsel %vm182, %v144, %v190
    %v199 = vsel %vm183, %v149, %v191
    %v200 = vsel %vm184, %v154, %v192
    %v201 = vsel %vm185, %v159, %v193
    %v202 = vsel %vm186, %v164, %v194
    %v203 = vsel %vm187, %v169, %v195
    %v204 = vsel %vm188, %v174, %v196
    %v205 = vsel %vm189, %v179, %v197
    %v206 = vld [vmem:[%s1] sm:$0xff]
    %v207 = vld [vmem:[%s1 + $0x8] sm:$0xff]
    %v208 = vld [vmem:[%s1 + $0x10] sm:$0xff]
    %v209 = vld [vmem:[%s1 + $0x18] sm:$0xff]
    %v210 = vld [vmem:[%s1 + $0x20] sm:$0xff]
    %v211 = vld [vmem:[%s1 + $0x28] sm:$0xff]
    %v212 = vld [vmem:[%s1 + $0x30] sm:$0xff]
    %v213 = vld [vmem:[%s1 + $0x38] sm:$0xff]
    %v215 = vsel %vm52, %v206, 0
    %v218 = vsel %vm52, %v207, 0
    %v221 = vsel %vm52, %v208, 0
    %v224 = vsel %vm52, %v209, 0
    %v227 = vsel %vm52, %v210, 0
    %v230 = vsel %vm52, %v211, 0
    %v233 = vsel %vm52, %v212, 0
    %v236 = vsel %vm52, %v213, 0
    %238 = vmatprep.subr.mxu0 0.0
    %239 = vmatpush1.msra.mxu0 %v36
    %240 = vmatprep.subr.mxu0 0.0
    %241 = vmatpush1.msra.mxu0 0.0
    %242 = vmatprep.subr.mxu0 0.0
    %243 = vmatpush1.msra.mxu0 0.0
    %244 = vmatprep.subr.mxu0 0.0
    %245 = vmatpush1.msra.mxu0 0.0
    %246 = vmatprep.subr.mxu0 0.0
    %247 = vmatpush1.msra.mxu0 0.0
    %248 = vmatprep.subr.mxu0 0.0
    %249 = vmatpush1.msra.mxu0 0.0
    %250 = vmatprep.subr.mxu0 0.0
    %251 = vmatpush1.msra.mxu0 0.0
    %252 = vmatprep.subr.mxu0 0.0
    %253 = vmatpush1.msra.mxu0 0.0
    %254 = vmatprep.subr.mxu0 0.0
    %255 = vmatpush1.msra.mxu0 0.0
    %256 = vmatprep.subr.mxu0 0.0
    %257 = vmatpush1.msra.mxu0 0.0
    %258 = vmatprep.subr.mxu0 0.0
    %259 = vmatpush1.msra.mxu0 0.0
    %260 = vmatprep.subr.mxu0 0.0
    %261 = vmatpush1.msra.mxu0 0.0
    %262 = vmatprep.subr.mxu0 0.0
    %263 = vmatpush1.msra.mxu0 0.0
    %264 = vmatprep.subr.mxu0 0.0
    %265 = vmatpush1.msra.mxu0 0.0
    %266 = vmatprep.subr.mxu0 0.0
    %267 = vmatpush1.msra.mxu0 0.0
    %268 = vmatprep.subr.mxu0 0.0
    %269 = vmatpush1.msra.mxu0 0.0
    %270 = vmatprep.subr.mxu0 0.0
    %271 = vmatpush1.msra.mxu0 0.0
    %272 = vmatprep.subr.mxu0 0.0
    %273 = vmatpush1.msra.mxu0 0.0
    %274 = vmatprep.subr.mxu0 0.0
    %275 = vmatpush1.msra.mxu0 0.0
    %276 = vmatprep.subr.mxu0 0.0
    %277 = vmatpush1.msra.mxu0 0.0
    %278 = vmatprep.subr.mxu0 0.0
    %279 = vmatpush1.msra.mxu0 0.0
    %280 = vmatprep.subr.mxu0 0.0
    %281 = vmatpush1.msra.mxu0 0.0
    %282 = vmatprep.subr.mxu0 0.0
    %283 = vmatpush1.msra.mxu0 0.0
    %284 = vmatprep.subr.mxu0 0.0
    %285 = vmatpush1.msra.mxu0 0.0
    %286 = vmatprep.subr.mxu0 0.0
    %287 = vmatpush1.msra.mxu0 0.0
    %288 = vmatprep.subr.mxu0 0.0
    %289 = vmatpush1.msra.mxu0 0.0
    %290 = vmatprep.subr.mxu0 0.0
    %291 = vmatpush1.msra.mxu0 0.0
    %292 = vmatprep.subr.mxu0 0.0
    %293 = vmatpush1.msra.mxu0 0.0
    %294 = vmatprep.subr.mxu0 0.0
    %295 = vmatpush1.msra.mxu0 0.0
    %296 = vmatprep.subr.mxu0 0.0
    %297 = vmatpush1.msra.mxu0 0.0
    %298 = vmatprep.subr.mxu0 0.0
    %299 = vmatpush1.msra.mxu0 0.0
    %300 = vmatprep.subr.mxu0 0.0
    %301 = vmatpush1.msra.mxu0 0.0
    %302 = vmatprep.mubr.f32.mxu0 0.0
    %303 = vmatmul.mubr.f32.gmra.mrb[0].mxu0 %v215
    %v304 = vpop.f32.mrb[0].mxu0
    %v305 = vadd.f32 %v50, %v304
    %v306 = vpop.f32.mrb[0].mxu0
    %307 = vmatprep.mubr.f32.mxu0 0.0
    %308 = vmatmul.mubr.f32.gmra.mrb[0].mxu0 %v218
    %v309 = vpop.f32.mrb[0].mxu0
    %v310 = vadd.f32 %v50, %v309
    %v311 = vpop.f32.mrb[0].mxu0
    %312 = vmatprep.mubr.f32.mxu0 0.0
    %313 = vmatmul.mubr.f32.gmra.mrb[0].mxu0 %v221
    %v314 = vpop.f32.mrb[0].mxu0
    %v315 = vadd.f32 %v50, %v314
    %v316 = vpop.f32.mrb[0].mxu0
    %317 = vmatprep.mubr.f32.mxu0 0.0
    %318 = vmatmul.mubr.f32.gmra.mrb[0].mxu0 %v224
    %v319 = vpop.f32.mrb[0].mxu0
    %v320 = vadd.f32 %v50, %v319
    %v321 = vpop.f32.mrb[0].mxu0
    %322 = vmatprep.mubr.f32.mxu0 0.0
    %323 = vmatmul.mubr.f32.gmra.mrb[0].mxu0 %v227
    %v324 = vpop.f32.mrb[0].mxu0
    %v325 = vadd.f32 %v50, %v324
    %v326 = vpop.f32.mrb[0].mxu0
    %327 = vmatprep.mubr.f32.mxu0 0.0
    %328 = vmatmul.mubr.f32.gmra.mrb[0].mxu0 %v230
    %v329 = vpop.f32.mrb[0].mxu0
    %v330 = vadd.f32 %v50, %v329
    %v331 = vpop.f32.mrb[0].mxu0
    %332 = vmatprep.mubr.f32.mxu0 0.0
    %333 = vmatmul.mubr.f32.gmra.mrb[0].mxu0 %v233
    %v334 = vpop.f32.mrb[0].mxu0
    %v335 = vadd.f32 %v50, %v334
    %v336 = vpop.f32.mrb[0].mxu0
    %337 = vmatprep.mubr.f32.mxu0 0.0
    %338 = vmatmul.mubr.f32.gmra.mrb[0].mxu0 %v236
    %v339 = vpop.f32.mrb[0].mxu0
    %v340 = vadd.f32 %v50, %v339
    %v341 = vpop.f32.mrb[0].mxu0
    %342 = vdwg.mxu0
    %vm343 = vcmp.gt.f32.partialorder %v305, 0.0
    %vm344 = vcmp.gt.f32.partialorder %v310, 0.0
    %vm345 = vcmp.gt.f32.partialorder %v315, 0.0
    %vm346 = vcmp.gt.f32.partialorder %v320, 0.0
    %vm347 = vcmp.gt.f32.partialorder %v325, 0.0
    %vm348 = vcmp.gt.f32.partialorder %v330, 0.0
    %vm349 = vcmp.gt.f32.partialorder %v335, 0.0
    %vm350 = vcmp.gt.f32.partialorder %v340, 0.0
    %v351 = vmul.f32 %v305, 0.01
    %v352 = vmul.f32 %v310, 0.01
    %v353 = vmul.f32 %v315, 0.01
    %v354 = vmul.f32 %v320, 0.01
    %v355 = vmul.f32 %v325, 0.01
    %v356 = vmul.f32 %v330, 0.01
    %v357 = vmul.f32 %v335, 0.01
    %v358 = vmul.f32 %v340, 0.01
    %v359 = vsel %vm343, %v305, %v351
    %v360 = vsel %vm344, %v310, %v352
    %v361 = vsel %vm345, %v315, %v353
    %v362 = vsel %vm346, %v320, %v354
    %v363 = vsel %vm347, %v325, %v355
    %v364 = vsel %vm348, %v330, %v356
    %v365 = vsel %vm349, %v335, %v357
    %v366 = vsel %vm350, %v340, %v358
    %v367 = vmax.f32 %v198, %v359
    %v368 = vmax.f32 %v199, %v360
    %v369 = vmax.f32 %v200, %v361
    %v370 = vmax.f32 %v201, %v362
    %v371 = vmax.f32 %v202, %v363
    %v372 = vmax.f32 %v203, %v364
    %v373 = vmax.f32 %v204, %v365
    %v374 = vmax.f32 %v205, %v366
    %vm375 = vcmask 367616
    %v376 = vsel %vm375, %v367, 0.0
    %v377 = vsel %vm375, %v368, 0.0
    %v378 = vadd.f32 %v376, %v377
    %v379 = vsel %vm375, %v369, 0.0
    %v380 = vadd.f32 %v378, %v379
    %v381 = vsel %vm375, %v370, 0.0
    %v382 = vadd.f32 %v380, %v381
    %v383 = vsel %vm375, %v371, 0.0
    %v384 = vadd.f32 %v382, %v383
    %v385 = vsel %vm375, %v372, 0.0
    %v386 = vadd.f32 %v384, %v385
    %v387 = vsel %vm375, %v373, 0.0
    %v388 = vadd.f32 %v386, %v387
    %v389 = vsel %vm375, %v374, 0.0
    %v390 = vadd.f32 %v388, %v389
    %v391 = vrot.slane %v390, 4
    %v392 = vadd.f32 %v390, %v391
    %v393 = vrot.slane %v392, 2
    %v394 = vadd.f32 %v392, %v393
    %v395 = vrot.slane %v394, 1
    %v396 = vadd.f32 %v394, %v395
    %v397 = vmul.f32 %v367, %v367
    %v398 = vmul.f32 %v368, %v368
    %v399 = vmul.f32 %v369, %v369
    %v400 = vmul.f32 %v370, %v370
    %v401 = vmul.f32 %v371, %v371
    %v402 = vmul.f32 %v372, %v372
    %v403 = vmul.f32 %v373, %v373
    %v404 = vmul.f32 %v374, %v374
    %v405 = vsel %vm375, %v397, 0.0
    %v406 = vsel %vm375, %v398, 0.0
    %v407 = vadd.f32 %v405, %v406
    %v408 = vsel %vm375, %v399, 0.0
    %v409 = vadd.f32 %v407, %v408
    %v410 = vsel %vm375, %v400, 0.0
    %v411 = vadd.f32 %v409, %v410
    %v412 = vsel %vm375, %v401, 0.0
    %v413 = vadd.f32 %v411, %v412
    %v414 = vsel %vm375, %v402, 0.0
    %v415 = vadd.f32 %v413, %v414
    %v416 = vsel %vm375, %v403, 0.0
    %v417 = vadd.f32 %v415, %v416
    %v418 = vsel %vm375, %v404, 0.0
    %v419 = vadd.f32 %v417, %v418
    %v420 = vrot.slane %v419, 4
    %v421 = vadd.f32 %v419, %v420
    %v422 = vrot.slane %v421, 2
    %v423 = vadd.f32 %v421, %v422
    %v424 = vrot.slane %v423, 1
    %v425 = vadd.f32 %v423, %v424
    %v426 = vrcp.pop 64.0
    %v427 = vmul.f32 %v396, %v426
    %v428 = vmul.f32 %v425, %v426
    %v429 = vmul.f32 %v427, %v427
    %v430 = vsub.f32 %v428, %v429
    %v431 = vsub.f32 %v367, %v427
    %v432 = vsub.f32 %v368, %v427
    %v433 = vsub.f32 %v369, %v427
    %v434 = vsub.f32 %v370, %v427
    %v435 = vsub.f32 %v371, %v427
    %v436 = vsub.f32 %v372, %v427
    %v437 = vsub.f32 %v373, %v427
    %v438 = vsub.f32 %v374, %v427
    %v439 = vadd.f32 %v430, 1e-05
    %v440 = vrsqrt.pop %v439
    %v441 = vmul.f32 %v431, %v440
    %v442 = vmul.f32 %v432, %v440
    %v443 = vmul.f32 %v433, %v440
    %v444 = vmul.f32 %v434, %v440
    %v445 = vmul.f32 %v435, %v440
    %v446 = vmul.f32 %v436, %v440
    %v447 = vmul.f32 %v437, %v440
    %v448 = vmul.f32 %v438, %v440
    %449 = vst.msk [vmem:[#allocation2] sm:$0xff] %vm375, %v441
    %450 = vst.msk [vmem:[#allocation2 + $0x8] sm:$0xff] %vm375, %v442
    %451 = vst.msk [vmem:[#allocation2 + $0x10] sm:$0xff] %vm375, %v443
    %452 = vst.msk [vmem:[#allocation2 + $0x18] sm:$0xff] %vm375, %v444
    %453 = vst.msk [vmem:[#allocation2 + $0x20] sm:$0xff] %vm375, %v445
    %454 = vst.msk [vmem:[#allocation2 + $0x28] sm:$0xff] %vm375, %v446
    %455 = vst.msk [vmem:[#allocation2 + $0x30] sm:$0xff] %vm375, %v447
    %456 = vst.msk [vmem:[#allocation2 + $0x38] sm:$0xff] %vm375, %v448
    %v457 = vld [vmem:[%s4] sm:$0xff]
    %v458 = vld [vmem:[%s4 + $0x8] sm:$0xff]
    %v459 = vld [vmem:[%s4 + $0x10] sm:$0xff]
    %v460 = vld [vmem:[%s4 + $0x18] sm:$0xff]
    %v461 = vld [vmem:[%s4 + $0x20] sm:$0xff]
    %v462 = vld [vmem:[%s4 + $0x28] sm:$0xff]
    %v463 = vld [vmem:[%s4 + $0x30] sm:$0xff]
    %v464 = vld [vmem:[%s4 + $0x38] sm:$0xff]
    %v465 = vld [vmem:[%s4 + $0x40] sm:$0xff]
    %v466 = vld [vmem:[%s4 + $0x48] sm:$0xff]
    %v467 = vld [vmem:[%s4 + $0x50] sm:$0xff]
    %v468 = vld [vmem:[%s4 + $0x58] sm:$0xff]
    %v469 = vld [vmem:[%s4 + $0x60] sm:$0xff]
    %v470 = vld [vmem:[%s4 + $0x68] sm:$0xff]
    %v471 = vld [vmem:[%s4 + $0x70] sm:$0xff]
    %v472 = vld [vmem:[%s4 + $0x78] sm:$0xff]
    %v473 = vld [vmem:[%s4 + $0x80] sm:$0xff]
    %v474 = vld [vmem:[%s4 + $0x88] sm:$0xff]
    %v475 = vld [vmem:[%s4 + $0x90] sm:$0xff]
    %v476 = vld [vmem:[%s4 + $0x98] sm:$0xff]
    %v477 = vld [vmem:[%s4 + $0xa0] sm:$0xff]
    %v478 = vld [vmem:[%s4 + $0xa8] sm:$0xff]
    %v479 = vld [vmem:[%s4 + $0xb0] sm:$0xff]
    %v480 = vld [vmem:[%s4 + $0xb8] sm:$0xff]
    %v481 = vld [vmem:[%s4 + $0xc0] sm:$0xff]
    %v482 = vld [vmem:[%s4 + $0xc8] sm:$0xff]
    %v483 = vld [vmem:[%s4 + $0xd0] sm:$0xff]
    %v484 = vld [vmem:[%s4 + $0xd8] sm:$0xff]
    %v485 = vld [vmem:[%s4 + $0xe0] sm:$0x1]
    %v486 = vld [vmem:[%s5] sm:$0x1]
    %v487 = vld [vmem:[#allocation2] ss:$2 sm:$0xff]
    %s488 = scalar_lea.vmem [#allocation2], 16
    %v489 = vld [vmem:[%s488] ss:$2 sm:$0xff]
    %s490 = scalar_lea.vmem [#allocation2], 32
    %v491 = vld [vmem:[%s490] ss:$2 sm:$0xff]
    %s492 = scalar_lea.vmem [#allocation2], 48
    %v493 = vld [vmem:[%s492] ss:$2 sm:$0x3f]
    %s494 = scalar_lea.vmem [#allocation2], 1
    %v495 = vld [vmem:[%s494] ss:$2 sm:$0xff]
    %s496 = scalar_lea.vmem [#allocation2], 17
    %v497 = vld [vmem:[%s496] ss:$2 sm:$0xff]
    %s498 = scalar_lea.vmem [#allocation2], 33
    %v499 = vld [vmem:[%s498] ss:$2 sm:$0xff]
    %s500 = scalar_lea.vmem [#allocation2], 49
    %v501 = vld [vmem:[%s500] ss:$2 sm:$0x3f]
    %s502 = scalar_lea.vmem [#allocation2], 2
    %v503 = vld [vmem:[%s502] ss:$2 sm:$0xff]
    %s504 = scalar_lea.vmem [#allocation2], 18
    %v505 = vld [vmem:[%s504] ss:$2 sm:$0xff]
    %s506 = scalar_lea.vmem [#allocation2], 34
    %v507 = vld [vmem:[%s506] ss:$2 sm:$0xff]
    %s508 = scalar_lea.vmem [#allocation2], 50
    %v509 = vld [vmem:[%s508] ss:$2 sm:$0x3f]
    %s510 = scalar_lea.vmem [#allocation2], 3
    %v511 = vld [vmem:[%s510] ss:$2 sm:$0xff]
    %s512 = scalar_lea.vmem [#allocation2], 19
    %v513 = vld [vmem:[%s512] ss:$2 sm:$0xff]
    %s514 = scalar_lea.vmem [#allocation2], 35
    %v515 = vld [vmem:[%s514] ss:$2 sm:$0xff]
    %s516 = scalar_lea.vmem [#allocation2], 51
    %v517 = vld [vmem:[%s516] ss:$2 sm:$0x3f]
    %s518 = scalar_lea.vmem [#allocation2], 4
    %v519 = vld [vmem:[%s518] ss:$2 sm:$0xff]
    %s520 = scalar_lea.vmem [#allocation2], 20
    %v521 = vld [vmem:[%s520] ss:$2 sm:$0xff]
    %s522 = scalar_lea.vmem [#allocation2], 36
    %v523 = vld [vmem:[%s522] ss:$2 sm:$0xff]
    %s524 = scalar_lea.vmem [#allocation2], 52
    %v525 = vld [vmem:[%s524] ss:$2 sm:$0x3f]
    %530 = vrot.lane.b32.xlu0 %v495, 45
    %v531 = vpop.permute.xlu0 %530
    %532 = vrot.lane.b32.xlu0 %v497, 45
    %v533 = vpop.permute.xlu0 %532
    %534 = vrot.lane.b32.xlu0 %v499, 45
    %v535 = vpop.permute.xlu0 %534
    %536 = vrot.lane.b32.xlu0 %v501, 45
    %v537 = vpop.permute.xlu0 %536
    %546 = vrot.lane.b32.xlu0 %v503, 90
    %v547 = vpop.permute.xlu0 %546
    %548 = vrot.lane.b32.xlu0 %v505, 90
    %v549 = vpop.permute.xlu0 %548
    %550 = vrot.lane.b32.xlu0 %v507, 90
    %v551 = vpop.permute.xlu0 %550
    %552 = vrot.lane.b32.xlu0 %v509, 90
    %v553 = vpop.permute.xlu0 %552
    %562 = vrot.lane.b32.xlu0 %v511, 7
    %v563 = vpop.permute.xlu0 %562
    %564 = vrot.lane.b32.xlu0 %v513, 7
    %v565 = vpop.permute.xlu0 %564
    %566 = vrot.lane.b32.xlu0 %v515, 7
    %v567 = vpop.permute.xlu0 %566
    %568 = vrot.lane.b32.xlu0 %v517, 7
    %v569 = vpop.permute.xlu0 %568
    %578 = vrot.lane.b32.xlu0 %v519, 52
    %v579 = vpop.permute.xlu0 %578
    %580 = vrot.lane.b32.xlu0 %v521, 52
    %v581 = vpop.permute.xlu0 %580
    %582 = vrot.lane.b32.xlu0 %v523, 52
    %v583 = vpop.permute.xlu0 %582
    %584 = vrot.lane.b32.xlu0 %v525, 52
    %v585 = vpop.permute.xlu0 %584
    %v590 = vsel %vm375, %v487, %v531
    %v591 = vsel %vm375, %v489, %v533
    %v592 = vsel %vm375, %v491, %v535
    %v593 = vsel %vm375, %v493, %v537
    %vm594 = vcmask 736256
    %v595 = vsel %vm594, %v590, %v547
    %v596 = vsel %vm594, %v591, %v549
    %v597 = vsel %vm594, %v592, %v551
    %v598 = vsel %vm594, %v593, %v553
    %vm599 = vcmask 56320
    %v600 = vsel %vm599, %v547, %v563
    %v601 = vsel %vm599, %v549, %v565
    %v602 = vsel %vm599, %v551, %v567
    %v603 = vsel %vm599, %v553, %v569
    %vm604 = vcmask 424960
    %v605 = vsel %vm604, %v600, %v579
    %v606 = vsel %vm604, %v601, %v581
    %v607 = vsel %vm604, %v602, %v583
    %v608 = vsel %vm604, %v603, %v585
    %s609 = scalar_lea.vmem [#allocation2], 5
    %v610 = vld [vmem:[%s609] ss:$2 sm:$0xff]
    %s611 = scalar_lea.vmem [#allocation2], 21
    %v612 = vld [vmem:[%s611] ss:$2 sm:$0xff]
    %s613 = scalar_lea.vmem [#allocation2], 37
    %v614 = vld [vmem:[%s613] ss:$2 sm:$0xff]
    %s615 = scalar_lea.vmem [#allocation2], 53
    %v616 = vld [vmem:[%s615] ss:$2 sm:$0x3f]
    %617 = vrot.lane.b32.xlu0 %v503, 45
    %v618 = vpop.permute.xlu0 %617
    %619 = vrot.lane.b32.xlu0 %v505, 45
    %v620 = vpop.permute.xlu0 %619
    %621 = vrot.lane.b32.xlu0 %v507, 45
    %v622 = vpop.permute.xlu0 %621
    %623 = vrot.lane.b32.xlu0 %v509, 45
    %v624 = vpop.permute.xlu0 %623
    %629 = vrot.lane.b32.xlu0 %v511, 90
    %v630 = vpop.permute.xlu0 %629
    %631 = vrot.lane.b32.xlu0 %v513, 90
    %v632 = vpop.permute.xlu0 %631
    %633 = vrot.lane.b32.xlu0 %v515, 90
    %v634 = vpop.permute.xlu0 %633
    %635 = vrot.lane.b32.xlu0 %v517, 90
    %v636 = vpop.permute.xlu0 %635
    %641 = vrot.lane.b32.xlu0 %v519, 7
    %v642 = vpop.permute.xlu0 %641
    %643 = vrot.lane.b32.xlu0 %v521, 7
    %v644 = vpop.permute.xlu0 %643
    %645 = vrot.lane.b32.xlu0 %v523, 7
    %v646 = vpop.permute.xlu0 %645
    %647 = vrot.lane.b32.xlu0 %v525, 7
    %v648 = vpop.permute.xlu0 %647
    %657 = vrot.lane.b32.xlu0 %v610, 52
    %v658 = vpop.permute.xlu0 %657
    %659 = vrot.lane.b32.xlu0 %v612, 52
    %v660 = vpop.permute.xlu0 %659
    %661 = vrot.lane.b32.xlu0 %v614, 52
    %v662 = vpop.permute.xlu0 %661
    %663 = vrot.lane.b32.xlu0 %v616, 52
    %v664 = vpop.permute.xlu0 %663
    %v669 = vsel %vm375, %v495, %v618
    %v670 = vsel %vm375, %v497, %v620
    %v671 = vsel %vm375, %v499, %v622
    %v672 = vsel %vm375, %v501, %v624
    %v673 = vsel %vm594, %v669, %v630
    %v674 = vsel %vm594, %v670, %v632
    %v675 = vsel %vm594, %v671, %v634
    %v676 = vsel %vm594, %v672, %v636
    %v677 = vsel %vm599, %v630, %v642
    %v678 = vsel %vm599, %v632, %v644
    %v679 = vsel %vm599, %v634, %v646
    %v680 = vsel %vm599, %v636, %v648
    %v681 = vsel %vm604, %v677, %v658
    %v682 = vsel %vm604, %v678, %v660
    %v683 = vsel %vm604, %v679, %v662
    %v684 = vsel %vm604, %v680, %v664
    %v686 = vlaneseq
    %v687 = vshrl.u32 %v686, 7
    %v688 = vsub.s32 0, %v687
    %v689 = vrot.slane %v486, %v688
    %vm691 = vcmask 793600
    %v693 = vsel %vm691, %v605, 0
    %v696 = vsel %vm691, %v606, 0
    %v699 = vsel %vm691, %v607, 0
    %v702 = vsel %vm691, %v608, 0
    %vm704 = vcmask 1040384
    %v706 = vsel %vm704, %v485, 0
    %708 = vmatprep.subr.mxu0 0.0
    %709 = vmatpush1.msra.mxu0 %v457
    %710 = vmatprep.subr.mxu0 0.0
    %711 = vmatpush1.msra.mxu0 %v458
    %712 = vmatprep.subr.mxu0 0.0
    %713 = vmatpush1.msra.mxu0 %v459
    %714 = vmatprep.subr.mxu0 0.0
    %715 = vmatpush1.msra.mxu0 %v460
    %716 = vmatprep.subr.mxu0 0.0
    %717 = vmatpush1.msra.mxu0 %v461
    %718 = vmatprep.subr.mxu0 0.0
    %719 = vmatpush1.msra.mxu0 %v462
    %720 = vmatprep.subr.mxu0 0.0
    %721 = vmatpush1.msra.mxu0 %v463
    %722 = vmatprep.subr.mxu0 0.0
    %723 = vmatpush1.msra.mxu0 %v464
    %724 = vmatprep.subr.mxu0 0.0
    %725 = vmatpush1.msra.mxu0 %v465
    %726 = vmatprep.subr.mxu0 0.0
    %727 = vmatpush1.msra.mxu0 %v466
    %728 = vmatprep.subr.mxu0 0.0
    %729 = vmatpush1.msra.mxu0 %v467
    %730 = vmatprep.subr.mxu0 0.0
    %731 = vmatpush1.msra.mxu0 %v468
    %732 = vmatprep.subr.mxu0 0.0
    %733 = vmatpush1.msra.mxu0 %v469
    %734 = vmatprep.subr.mxu0 0.0
    %735 = vmatpush1.msra.mxu0 %v470
    %736 = vmatprep.subr.mxu0 0.0
    %737 = vmatpush1.msra.mxu0 %v471
    %738 = vmatprep.subr.mxu0 0.0
    %739 = vmatpush1.msra.mxu0 %v472
    %740 = vmatprep.subr.mxu0 0.0
    %741 = vmatpush1.msra.mxu0 %v473
    %742 = vmatprep.subr.mxu0 0.0
    %743 = vmatpush1.msra.mxu0 %v474
    %744 = vmatprep.subr.mxu0 0.0
    %745 = vmatpush1.msra.mxu0 %v475
    %746 = vmatprep.subr.mxu0 0.0
    %747 = vmatpush1.msra.mxu0 %v476
    %748 = vmatprep.subr.mxu0 0.0
    %749 = vmatpush1.msra.mxu0 %v477
    %750 = vmatprep.subr.mxu0 0.0
    %751 = vmatpush1.msra.mxu0 %v478
    %752 = vmatprep.subr.mxu0 0.0
    %753 = vmatpush1.msra.mxu0 %v479
    %754 = vmatprep.subr.mxu0 0.0
    %755 = vmatpush1.msra.mxu0 %v480
    %756 = vmatprep.subr.mxu0 0.0
    %757 = vmatpush1.msra.mxu0 %v481
    %758 = vmatprep.subr.mxu0 0.0
    %759 = vmatpush1.msra.mxu0 %v482
    %760 = vmatprep.subr.mxu0 0.0
    %761 = vmatpush1.msra.mxu0 %v483
    %762 = vmatprep.subr.mxu0 0.0
    %763 = vmatpush1.msra.mxu0 %v484
    %764 = vmatprep.subr.mxu0 0.0
    %765 = vmatpush1.msra.mxu0 %v706
    %766 = vmatprep.subr.mxu0 0.0
    %767 = vmatpush1.msra.mxu0 0.0
    %768 = vmatprep.subr.mxu0 0.0
    %769 = vmatpush1.msra.mxu0 0.0
    %770 = vmatprep.subr.mxu0 0.0
    %771 = vmatpush1.msra.mxu0 0.0
    %772 = vmatprep.mubr.f32.mxu0 %v693
    %773 = vmatmul.mubr.f32.gmra.mrb[0].mxu0 %v595
    %v774 = vpop.f32.mrb[0].mxu0
    %v775 = vadd.f32 %v689, %v774
    %v776 = vpop.f32.mrb[0].mxu0
    %777 = vmatprep.mubr.f32.mxu0 %v696
    %778 = vmatmul.mubr.f32.gmra.mrb[0].mxu0 %v596
    %v779 = vpop.f32.mrb[0].mxu0
    %v780 = vadd.f32 %v689, %v779
    %v781 = vpop.f32.mrb[0].mxu0
    %782 = vmatprep.mubr.f32.mxu0 %v699
    %783 = vmatmul.mubr.f32.gmra.mrb[0].mxu0 %v597
    %v784 = vpop.f32.mrb[0].mxu0
    %v785 = vadd.f32 %v689, %v784
    %v786 = vpop.f32.mrb[0].mxu0
    %787 = vmatprep.mubr.f32.mxu0 %v702
    %788 = vmatmul.mubr.f32.gmra.mrb[0].mxu0 %v598
    %v789 = vpop.f32.mrb[0].mxu0
    %v790 = vadd.f32 %v689, %v789
    %v791 = vpop.f32.mrb[0].mxu0
    %792 = vdwg.mxu0
    %vm793 = vcmp.gt.f32.partialorder %v775, 0.0
    %vm794 = vcmp.gt.f32.partialorder %v780, 0.0
    %vm795 = vcmp.gt.f32.partialorder %v785, 0.0
    %vm796 = vcmp.gt.f32.partialorder %v790, 0.0
    %v797 = vmul.f32 %v775, 0.01
    %v798 = vmul.f32 %v780, 0.01
    %v799 = vmul.f32 %v785, 0.01
    %v800 = vmul.f32 %v790, 0.01
    %v801 = vsel %vm793, %v775, %v797
    %v802 = vsel %vm794, %v780, %v798
    %v803 = vsel %vm795, %v785, %v799
    %v804 = vsel %vm796, %v790, %v800
    %v806 = vsel %vm691, %v681, 0
    %v809 = vsel %vm691, %v682, 0
    %v812 = vsel %vm691, %v683, 0
    %v815 = vsel %vm691, %v684, 0
    %817 = vmatprep.subr.mxu0 0.0
    %818 = vmatpush1.msra.mxu0 %v457
    %819 = vmatprep.subr.mxu0 0.0
    %820 = vmatpush1.msra.mxu0 %v458
    %821 = vmatprep.subr.mxu0 0.0
    %822 = vmatpush1.msra.mxu0 %v459
    %823 = vmatprep.subr.mxu0 0.0
    %824 = vmatpush1.msra.mxu0 %v460
    %825 = vmatprep.subr.mxu0 0.0
    %826 = vmatpush1.msra.mxu0 %v461
    %827 = vmatprep.subr.mxu0 0.0
    %828 = vmatpush1.msra.mxu0 %v462
    %829 = vmatprep.subr.mxu0 0.0
    %830 = vmatpush1.msra.mxu0 %v463
    %831 = vmatprep.subr.mxu0 0.0
    %832 = vmatpush1.msra.mxu0 %v464
    %833 = vmatprep.subr.mxu0 0.0
    %834 = vmatpush1.msra.mxu0 %v465
    %835 = vmatprep.subr.mxu0 0.0
    %836 = vmatpush1.msra.mxu0 %v466
    %837 = vmatprep.subr.mxu0 0.0
    %838 = vmatpush1.msra.mxu0 %v467
    %839 = vmatprep.subr.mxu0 0.0
    %840 = vmatpush1.msra.mxu0 %v468
    %841 = vmatprep.subr.mxu0 0.0
    %842 = vmatpush1.msra.mxu0 %v469
    %843 = vmatprep.subr.mxu0 0.0
    %844 = vmatpush1.msra.mxu0 %v470
    %845 = vmatprep.subr.mxu0 0.0
    %846 = vmatpush1.msra.mxu0 %v471
    %847 = vmatprep.subr.mxu0 0.0
    %848 = vmatpush1.msra.mxu0 %v472
    %849 = vmatprep.subr.mxu0 0.0
    %850 = vmatpush1.msra.mxu0 %v473
    %851 = vmatprep.subr.mxu0 0.0
    %852 = vmatpush1.msra.mxu0 %v474
    %853 = vmatprep.subr.mxu0 0.0
    %854 = vmatpush1.msra.mxu0 %v475
    %855 = vmatprep.subr.mxu0 0.0
    %856 = vmatpush1.msra.mxu0 %v476
    %857 = vmatprep.subr.mxu0 0.0
    %858 = vmatpush1.msra.mxu0 %v477
    %859 = vmatprep.subr.mxu0 0.0
    %860 = vmatpush1.msra.mxu0 %v478
    %861 = vmatprep.subr.mxu0 0.0
    %862 = vmatpush1.msra.mxu0 %v479
    %863 = vmatprep.subr.mxu0 0.0
    %864 = vmatpush1.msra.mxu0 %v480
    %865 = vmatprep.subr.mxu0 0.0
    %866 = vmatpush1.msra.mxu0 %v481
    %867 = vmatprep.subr.mxu0 0.0
    %868 = vmatpush1.msra.mxu0 %v482
    %869 = vmatprep.subr.mxu0 0.0
    %870 = vmatpush1.msra.mxu0 %v483
    %871 = vmatprep.subr.mxu0 0.0
    %872 = vmatpush1.msra.mxu0 %v484
    %873 = vmatprep.subr.mxu0 0.0
    %874 = vmatpush1.msra.mxu0 %v706
    %875 = vmatprep.subr.mxu0 0.0
    %876 = vmatpush1.msra.mxu0 0.0
    %877 = vmatprep.subr.mxu0 0.0
    %878 = vmatpush1.msra.mxu0 0.0
    %879 = vmatprep.subr.mxu0 0.0
    %880 = vmatpush1.msra.mxu0 0.0
    %881 = vmatprep.mubr.f32.mxu0 %v806
    %882 = vmatmul.mubr.f32.gmra.mrb[0].mxu0 %v673
    %v883 = vpop.f32.mrb[0].mxu0
    %v884 = vadd.f32 %v689, %v883
    %v885 = vpop.f32.mrb[0].mxu0
    %886 = vmatprep.mubr.f32.mxu0 %v809
    %887 = vmatmul.mubr.f32.gmra.mrb[0].mxu0 %v674
    %v888 = vpop.f32.mrb[0].mxu0
    %v889 = vadd.f32 %v689, %v888
    %v890 = vpop.f32.mrb[0].mxu0
    %891 = vmatprep.mubr.f32.mxu0 %v812
    %892 = vmatmul.mubr.f32.gmra.mrb[0].mxu0 %v675
    %v893 = vpop.f32.mrb[0].mxu0
    %v894 = vadd.f32 %v689, %v893
    %v895 = vpop.f32.mrb[0].mxu0
    %896 = vmatprep.mubr.f32.mxu0 %v815
    %897 = vmatmul.mubr.f32.gmra.mrb[0].mxu0 %v676
    %v898 = vpop.f32.mrb[0].mxu0
    %v899 = vadd.f32 %v689, %v898
    %v900 = vpop.f32.mrb[0].mxu0
    %901 = vdwg.mxu0
    %vm902 = vcmp.gt.f32.partialorder %v884, 0.0
    %vm903 = vcmp.gt.f32.partialorder %v889, 0.0
    %vm904 = vcmp.gt.f32.partialorder %v894, 0.0
    %vm905 = vcmp.gt.f32.partialorder %v899, 0.0
    %v906 = vmul.f32 %v884, 0.01
    %v907 = vmul.f32 %v889, 0.01
    %v908 = vmul.f32 %v894, 0.01
    %v909 = vmul.f32 %v899, 0.01
    %v910 = vsel %vm902, %v884, %v906
    %v911 = vsel %vm903, %v889, %v907
    %v912 = vsel %vm904, %v894, %v908
    %v913 = vsel %vm905, %v899, %v909
    %v914 = vmax.f32 %v801, %v910
    %v915 = vmax.f32 %v802, %v911
    %v916 = vmax.f32 %v803, %v912
    %v917 = vmax.f32 %v804, %v913
    %v918 = vlaneseq
    %v919 = vshrl.u32 %v918, 7
    %v920 = vadd.s32 %v919, 8
    %v921 = vadd.s32 %v919, 16
    %v922 = vadd.s32 %v919, 24
    %vm923 = vcmp.lt.s32.totalorder %v919, 0
    %v924 = vsub.s32 0, %v919
    %v925 = vsel %vm923, %v924, %v919
    %v926 = vshrl.u32 %v925, 3
    %v927 = vand.u32 %v925, 7
    %v928 = vsub.s32 0, %v927
    %v929 = vsel %vm923, %v928, %v927
    %vm930 = vcmp.lt.s32.totalorder %v920, 0
    %v931 = vsub.s32 0, %v920
    %v932 = vsel %vm930, %v931, %v920
    %v933 = vshrl.u32 %v932, 3
    %v934 = vand.u32 %v932, 7
    %v935 = vsub.s32 0, %v934
    %v936 = vsel %vm930, %v935, %v934
    %vm937 = vcmp.lt.s32.totalorder %v921, 0
    %v938 = vsub.s32 0, %v921
    %v939 = vsel %vm937, %v938, %v921
    %v940 = vshrl.u32 %v939, 3
    %v941 = vand.u32 %v939, 7
    %v942 = vsub.s32 0, %v941
    %v943 = vsel %vm937, %v942, %v941
    %vm944 = vcmp.lt.s32.totalorder %v922, 0
    %v945 = vsub.s32 0, %v922
    %v946 = vsel %vm944, %v945, %v922
    %v947 = vshrl.u32 %v946, 3
    %v948 = vand.u32 %v946, 7
    %v949 = vsub.s32 0, %v948
    %v950 = vsel %vm944, %v949, %v948
    %vm951 = vcmp.ne.s32.totalorder %v929, 0
    %vm952 = vcmp.ne.s32.totalorder %v936, 0
    %vm953 = vcmp.ne.s32.totalorder %v943, 0
    %vm954 = vcmp.ne.s32.totalorder %v950, 0
    %vm955 = vcmp.lt.s32.totalorder %v929, 0
    %vm956 = vcmp.lt.s32.totalorder %v936, 0
    %vm957 = vcmp.lt.s32.totalorder %v943, 0
    %vm958 = vcmp.lt.s32.totalorder %v950, 0
    %vm959 = vmand %vm955, %vm951
    %vm960 = vmand %vm956, %vm952
    %vm961 = vmand %vm957, %vm953
    %vm962 = vmand %vm958, %vm954
    %v963 = vadd.s32 %v929, 8
    %v964 = vadd.s32 %v936, 8
    %v965 = vadd.s32 %v943, 8
    %v966 = vadd.s32 %v950, 8
    %v967 = vsel %vm959, %v963, %v929
    %v968 = vsel %vm960, %v964, %v936
    %v969 = vsel %vm961, %v965, %v943
    %v970 = vsel %vm962, %v966, %v950
    %vm971 = vcmp.lt.s32.totalorder %v967, 6
    %vm972 = vcmp.lt.s32.totalorder %v968, 6
    %vm973 = vcmp.lt.s32.totalorder %v969, 6
    %vm974 = vcmp.lt.s32.totalorder %v970, 6
    %v975 = vsel %vm971, 1, 0
    %v976 = vsel %vm972, 1, 0
    %v977 = vsel %vm973, 1, 0
    %v978 = vsel %vm974, 1, 0
    %v979 = vcvt.s32.f32 %v975
    %v980 = vcvt.s32.f32 %v976
    %v981 = vcvt.s32.f32 %v977
    %v982 = vcvt.s32.f32 %v978
    %v983 = vmul.f32 %v914, %v979
    %v984 = vmul.f32 %v915, %v980
    %v985 = vmul.f32 %v916, %v981
    %v986 = vmul.f32 %v917, %v982
    %vm987 = vcmask 523264
    %v988 = vsel %vm987, %v983, 0.0
    %v989 = vsel %vm987, %v984, 0.0
    %v990 = vadd.f32 %v988, %v989
    %v991 = vsel %vm987, %v985, 0.0
    %v992 = vadd.f32 %v990, %v991
    %vm993 = vcmask 521216
    %v994 = vsel %vm993, %v986, 0.0
    %v995 = vadd.f32 %v992, %v994
    %v996 = vrot.slane %v995, 4
    %v997 = vadd.f32 %v995, %v996
    %v998 = vrot.slane %v997, 2
    %v999 = vadd.f32 %v997, %v998
    %v1000 = vrot.slane %v999, 1
    %v1001 = vadd.f32 %v999, %v1000
    %v1002 = vmul.f32 %v914, %v914
    %v1003 = vmul.f32 %v915, %v915
    %v1004 = vmul.f32 %v916, %v916
    %v1005 = vmul.f32 %v917, %v917
    %v1006 = vmul.f32 %v1002, %v979
    %v1007 = vmul.f32 %v1003, %v980
    %v1008 = vmul.f32 %v1004, %v981
    %v1009 = vmul.f32 %v1005, %v982
    %v1010 = vsel %vm987, %v1006, 0.0
    %v1011 = vsel %vm987, %v1007, 0.0
    %v1012 = vadd.f32 %v1010, %v1011
    %v1013 = vsel %vm987, %v1008, 0.0
    %v1014 = vadd.f32 %v1012, %v1013
    %v1015 = vsel %vm993, %v1009, 0.0
    %v1016 = vadd.f32 %v1014, %v1015
    %v1017 = vrot.slane %v1016, 4
    %v1018 = vadd.f32 %v1016, %v1017
    %v1019 = vrot.slane %v1018, 2
    %v1020 = vadd.f32 %v1018, %v1019
    %v1021 = vrot.slane %v1020, 1
    %v1022 = vadd.f32 %v1020, %v1021
    %v1023 = vrcp.pop 24.0
    %v1024 = vmul.f32 %v1001, %v1023
    %v1025 = vmul.f32 %v1022, %v1023
    %v1026 = vmul.f32 %v1024, %v1024
    %v1027 = vsub.f32 %v1025, %v1026
    %v1028 = vsub.f32 %v914, %v1024
    %v1029 = vsub.f32 %v915, %v1024
    %v1030 = vsub.f32 %v916, %v1024
    %v1031 = vsub.f32 %v917, %v1024
    %v1032 = vadd.f32 %v1027, 1e-05
    %v1033 = vrsqrt.pop %v1032
    %v1034 = vmul.f32 %v1028, %v1033
    %v1035 = vmul.f32 %v1029, %v1033
    %v1036 = vmul.f32 %v1030, %v1033
    %v1037 = vmul.f32 %v1031, %v1033
    %1038 = vst.msk [vmem:[#allocation3] sm:$0xff] %vm987, %v1034
    %1039 = vst.msk [vmem:[#allocation3 + $0x8] sm:$0xff] %vm987, %v1035
    %1040 = vst.msk [vmem:[#allocation3 + $0x10] sm:$0xff] %vm987, %v1036
    %1041 = vst.msk [vmem:[#allocation3 + $0x18] sm:$0x3f] %vm993, %v1037
    %v1042 = vld [vmem:[#allocation3] ss:$8 sm:$0xf]
    %s1043 = scalar_lea.vmem [#allocation3], 1
    %v1044 = vld [vmem:[%s1043] ss:$8 sm:$0xf]
    %s1045 = scalar_lea.vmem [#allocation3], 2
    %v1046 = vld [vmem:[%s1045] ss:$8 sm:$0xf]
    %s1047 = scalar_lea.vmem [#allocation3], 3
    %v1048 = vld [vmem:[%s1047] ss:$8 sm:$0xf]
    %s1049 = scalar_lea.vmem [#allocation3], 4
    %v1050 = vld [vmem:[%s1049] ss:$8 sm:$0xf]
    %s1051 = scalar_lea.vmem [#allocation3], 5
    %v1052 = vld [vmem:[%s1051] ss:$8 sm:$0xf]
    %1054 = vrot.lane.b32.xlu0 %v1044, 64
    %v1055 = vpop.permute.xlu0 %1054
    %1058 = vrot.lane.b32.xlu0 %v1048, 64
    %v1059 = vpop.permute.xlu0 %1058
    %1062 = vrot.lane.b32.xlu0 %v1052, 64
    %v1063 = vpop.permute.xlu0 %1062
    %v1065 = vsel %vm987, %v1042, %v1055
    %v1066 = vsel %vm987, %v1046, %v1059
    %v1067 = vsel %vm987, %v1050, %v1063
    %v1068 = vld [vmem:[%s6] sm:$0xff]
    %v1069 = vld [vmem:[%s6 + $0x8] sm:$0xff]
    %v1070 = vld [vmem:[%s6 + $0x10] sm:$0xff]
    %v1071 = vld [vmem:[%s6 + $0x18] sm:$0xff]
    %v1072 = vld [vmem:[%s6 + $0x20] sm:$0xff]
    %v1073 = vld [vmem:[%s6 + $0x28] sm:$0xff]
    %v1074 = vld [vmem:[%s6 + $0x30] sm:$0xff]
    %v1075 = vld [vmem:[%s6 + $0x38] sm:$0xff]
    %v1076 = vld [vmem:[%s6 + $0x40] sm:$0xff]
    %v1077 = vld [vmem:[%s6 + $0x48] sm:$0xff]
    %v1078 = vld [vmem:[%s6 + $0x50] sm:$0xff]
    %v1079 = vld [vmem:[%s6 + $0x58] sm:$0xff]
    %v1080 = vld [vmem:[%s6 + $0x60] sm:$0xff]
    %v1081 = vld [vmem:[%s6 + $0x68] sm:$0xff]
    %v1082 = vld [vmem:[%s6 + $0x70] sm:$0xff]
    %v1083 = vld [vmem:[%s6 + $0x78] sm:$0xff]
    %v1084 = vld [vmem:[%s6 + $0x80] sm:$0xff]
    %v1085 = vld [vmem:[%s6 + $0x88] sm:$0xff]
    %v1086 = vld [vmem:[%s6 + $0x90] sm:$0xff]
    %v1087 = vld [vmem:[%s6 + $0x98] sm:$0xff]
    %v1088 = vld [vmem:[%s6 + $0xa0] sm:$0xff]
    %v1089 = vld [vmem:[%s6 + $0xa8] sm:$0xff]
    %v1090 = vld [vmem:[%s6 + $0xb0] sm:$0xff]
    %v1091 = vld [vmem:[%s6 + $0xb8] sm:$0xff]
    %v1092 = vld [vmem:[%s6 + $0xc0] sm:$0xff]
    %v1093 = vld [vmem:[%s6 + $0xc8] sm:$0xff]
    %v1094 = vld [vmem:[%s6 + $0xd0] sm:$0xff]
    %v1095 = vld [vmem:[%s6 + $0xd8] sm:$0xff]
    %v1096 = vld [vmem:[%s6 + $0xe0] sm:$0xff]
    %v1097 = vld [vmem:[%s6 + $0xe8] sm:$0xff]
    %v1098 = vld [vmem:[%s6 + $0xf0] sm:$0xff]
    %v1099 = vld [vmem:[%s6 + $0xf8] sm:$0xff]
    %v1100 = vld [vmem:[%s6 + $0x100] sm:$0xff]
    %v1101 = vld [vmem:[%s6 + $0x108] sm:$0xff]
    %v1102 = vld [vmem:[%s6 + $0x110] sm:$0xff]
    %v1103 = vld [vmem:[%s6 + $0x118] sm:$0xff]
    %v1104 = vld [vmem:[%s6 + $0x120] sm:$0xff]
    %v1105 = vld [vmem:[%s6 + $0x128] sm:$0xff]
    %v1106 = vld [vmem:[%s6 + $0x130] sm:$0xff]
    %v1107 = vld [vmem:[%s6 + $0x138] sm:$0xff]
    %v1108 = vld [vmem:[%s6 + $0x140] sm:$0xff]
    %v1109 = vld [vmem:[%s6 + $0x148] sm:$0xff]
    %v1110 = vld [vmem:[%s6 + $0x150] sm:$0xff]
    %v1111 = vld [vmem:[%s6 + $0x158] sm:$0xff]
    %v1112 = vld [vmem:[%s6 + $0x160] sm:$0xff]
    %v1113 = vld [vmem:[%s6 + $0x168] sm:$0xff]
    %v1114 = vld [vmem:[%s6 + $0x170] sm:$0xff]
    %v1115 = vld [vmem:[%s6 + $0x178] sm:$0xff]
    %v1116 = vld [vmem:[%s7] sm:$0x1]
    %v1118 = vlaneseq
    %v1119 = vshrl.u32 %v1118, 7
    %v1120 = vsub.s32 0, %v1119
    %v1121 = vrot.slane %v1116, %v1120
    %1123 = vmatprep.subr.mxu0 0.0
    %1124 = vmatpush1.msra.mxu0 %v1068
    %1125 = vmatprep.subr.mxu0 0.0
    %1126 = vmatpush1.msra.mxu0 %v1069
    %1127 = vmatprep.subr.mxu0 0.0
    %1128 = vmatpush1.msra.mxu0 %v1070
    %1129 = vmatprep.subr.mxu0 0.0
    %1130 = vmatpush1.msra.mxu0 %v1071
    %1131 = vmatprep.subr.mxu0 0.0
    %1132 = vmatpush1.msra.mxu0 %v1072
    %1133 = vmatprep.subr.mxu0 0.0
    %1134 = vmatpush1.msra.mxu0 %v1073
    %1135 = vmatprep.subr.mxu0 0.0
    %1136 = vmatpush1.msra.mxu0 %v1074
    %1137 = vmatprep.subr.mxu0 0.0
    %1138 = vmatpush1.msra.mxu0 %v1075
    %1139 = vmatprep.subr.mxu0 0.0
    %1140 = vmatpush1.msra.mxu0 %v1076
    %1141 = vmatprep.subr.mxu0 0.0
    %1142 = vmatpush1.msra.mxu0 %v1077
    %1143 = vmatprep.subr.mxu0 0.0
    %1144 = vmatpush1.msra.mxu0 %v1078
    %1145 = vmatprep.subr.mxu0 0.0
    %1146 = vmatpush1.msra.mxu0 %v1079
    %1147 = vmatprep.subr.mxu0 0.0
    %1148 = vmatpush1.msra.mxu0 %v1080
    %1149 = vmatprep.subr.mxu0 0.0
    %1150 = vmatpush1.msra.mxu0 %v1081
    %1151 = vmatprep.subr.mxu0 0.0
    %1152 = vmatpush1.msra.mxu0 %v1082
    %1153 = vmatprep.subr.mxu0 0.0
    %1154 = vmatpush1.msra.mxu0 %v1083
    %1155 = vmatprep.subr.mxu0 0.0
    %1156 = vmatpush1.msra.mxu0 %v1084
    %1157 = vmatprep.subr.mxu0 0.0
    %1158 = vmatpush1.msra.mxu0 %v1085
    %1159 = vmatprep.subr.mxu0 0.0
    %1160 = vmatpush1.msra.mxu0 %v1086
    %1161 = vmatprep.subr.mxu0 0.0
    %1162 = vmatpush1.msra.mxu0 %v1087
    %1163 = vmatprep.subr.mxu0 0.0
    %1164 = vmatpush1.msra.mxu0 %v1088
    %1165 = vmatprep.subr.mxu0 0.0
    %1166 = vmatpush1.msra.mxu0 %v1089
    %1167 = vmatprep.subr.mxu0 0.0
    %1168 = vmatpush1.msra.mxu0 %v1090
    %1169 = vmatprep.subr.mxu0 0.0
    %1170 = vmatpush1.msra.mxu0 %v1091
    %1171 = vmatprep.subr.mxu0 0.0
    %1172 = vmatpush1.msra.mxu0 %v1092
    %1173 = vmatprep.subr.mxu0 0.0
    %1174 = vmatpush1.msra.mxu0 %v1093
    %1175 = vmatprep.subr.mxu0 0.0
    %1176 = vmatpush1.msra.mxu0 %v1094
    %1177 = vmatprep.subr.mxu0 0.0
    %1178 = vmatpush1.msra.mxu0 %v1095
    %1179 = vmatprep.subr.mxu0 0.0
    %1180 = vmatpush1.msra.mxu0 %v1096
    %1181 = vmatprep.subr.mxu0 0.0
    %1182 = vmatpush1.msra.mxu0 %v1097
    %1183 = vmatprep.subr.mxu0 0.0
    %1184 = vmatpush1.msra.mxu0 %v1098
    %1185 = vmatprep.subr.mxu0 0.0
    %1186 = vmatpush1.msra.mxu0 %v1099
    %1187 = vmatprep.mubr.f32.mxu0 %v1066
    %1188 = vmatmul.mubr.f32.gmra.mrb[0].mxu0 %v1065
    %v1189 = vpop.f32.mrb[0].mxu0
    %v1190 = vadd.f32 %v1121, %v1189
    %v1191 = vpop.f32.mrb[0].mxu0
    %1192 = vdwg.mxu0
    %1193 = vmatprep.subr.mxu0 0.0
    %1194 = vmatpush1.msra.mxu0 %v1100
    %1195 = vmatprep.subr.mxu0 0.0
    %1196 = vmatpush1.msra.mxu0 %v1101
    %1197 = vmatprep.subr.mxu0 0.0
    %1198 = vmatpush1.msra.mxu0 %v1102
    %1199 = vmatprep.subr.mxu0 0.0
    %1200 = vmatpush1.msra.mxu0 %v1103
    %1201 = vmatprep.subr.mxu0 0.0
    %1202 = vmatpush1.msra.mxu0 %v1104
    %1203 = vmatprep.subr.mxu0 0.0
    %1204 = vmatpush1.msra.mxu0 %v1105
    %1205 = vmatprep.subr.mxu0 0.0
    %1206 = vmatpush1.msra.mxu0 %v1106
    %1207 = vmatprep.subr.mxu0 0.0
    %1208 = vmatpush1.msra.mxu0 %v1107
    %1209 = vmatprep.subr.mxu0 0.0
    %1210 = vmatpush1.msra.mxu0 %v1108
    %1211 = vmatprep.subr.mxu0 0.0
    %1212 = vmatpush1.msra.mxu0 %v1109
    %1213 = vmatprep.subr.mxu0 0.0
    %1214 = vmatpush1.msra.mxu0 %v1110
    %1215 = vmatprep.subr.mxu0 0.0
    %1216 = vmatpush1.msra.mxu0 %v1111
    %1217 = vmatprep.subr.mxu0 0.0
    %1218 = vmatpush1.msra.mxu0 %v1112
    %1219 = vmatprep.subr.mxu0 0.0
    %1220 = vmatpush1.msra.mxu0 %v1113
    %1221 = vmatprep.subr.mxu0 0.0
    %1222 = vmatpush1.msra.mxu0 %v1114
    %1223 = vmatprep.subr.mxu0 0.0
    %1224 = vmatpush1.msra.mxu0 %v1115
    %1225 = vmatprep.subr.mxu0 0.0
    %1226 = vmatpush1.msra.mxu0 0.0
    %1227 = vmatprep.subr.mxu0 0.0
    %1228 = vmatpush1.msra.mxu0 0.0
    %1229 = vmatprep.subr.mxu0 0.0
    %1230 = vmatpush1.msra.mxu0 0.0
    %1231 = vmatprep.subr.mxu0 0.0
    %1232 = vmatpush1.msra.mxu0 0.0
    %1233 = vmatprep.subr.mxu0 0.0
    %1234 = vmatpush1.msra.mxu0 0.0
    %1235 = vmatprep.subr.mxu0 0.0
    %1236 = vmatpush1.msra.mxu0 0.0
    %1237 = vmatprep.subr.mxu0 0.0
    %1238 = vmatpush1.msra.mxu0 0.0
    %1239 = vmatprep.subr.mxu0 0.0
    %1240 = vmatpush1.msra.mxu0 0.0
    %1241 = vmatprep.subr.mxu0 0.0
    %1242 = vmatpush1.msra.mxu0 0.0
    %1243 = vmatprep.subr.mxu0 0.0
    %1244 = vmatpush1.msra.mxu0 0.0
    %1245 = vmatprep.subr.mxu0 0.0
    %1246 = vmatpush1.msra.mxu0 0.0
    %1247 = vmatprep.subr.mxu0 0.0
    %1248 = vmatpush1.msra.mxu0 0.0
    %1249 = vmatprep.subr.mxu0 0.0
    %1250 = vmatpush1.msra.mxu0 0.0
    %1251 = vmatprep.subr.mxu0 0.0
    %1252 = vmatpush1.msra.mxu0 0.0
    %1253 = vmatprep.subr.mxu0 0.0
    %1254 = vmatpush1.msra.mxu0 0.0
    %1255 = vmatprep.subr.mxu0 0.0
    %1256 = vmatpush1.msra.mxu0 0.0
    %1257 = vmatprep.mubr.f32.mxu0 0.0
    %1258 = vmatmul.mubr.f32.gmra.mrb[0].mxu0 %v1067
    %v1259 = vpop.f32.mrb[0].mxu0
    %v1260 = vadd.f32 %v1190, %v1259
    %v1261 = vpop.f32.mrb[0].mxu0
    %1262 = vdwg.mxu0
    %vm1263 = vcmp.gt.f32.partialorder %v1260, 0.0
    %v1264 = vmul.f32 %v1260, 0.01
    %v1265 = vsel %vm1263, %v1260, %v1264
    %vm1266 = vcmask 363520
    %v1267 = vsel %vm1266, %v1265, 0.0
    %v1268 = vrot.slane %v1267, 4
    %v1269 = vadd.f32 %v1267, %v1268
    %v1270 = vrot.slane %v1269, 2
    %v1271 = vadd.f32 %v1269, %v1270
    %v1272 = vrot.slane %v1271, 1
    %v1273 = vadd.f32 %v1271, %v1272
    %v1274 = vmul.f32 %v1265, %v1265
    %v1275 = vsel %vm1266, %v1274, 0.0
    %v1276 = vrot.slane %v1275, 4
    %v1277 = vadd.f32 %v1275, %v1276
    %v1278 = vrot.slane %v1277, 2
    %v1279 = vadd.f32 %v1277, %v1278
    %v1280 = vrot.slane %v1279, 1
    %v1281 = vadd.f32 %v1279, %v1280
    %v1282 = vrcp.pop 4.0
    %v1283 = vmul.f32 %v1273, %v1282
    %v1284 = vmul.f32 %v1281, %v1282
    %v1285 = vmul.f32 %v1283, %v1283
    %v1286 = vsub.f32 %v1284, %v1285
    %v1287 = vsub.f32 %v1265, %v1283
    %v1288 = vadd.f32 %v1286, 1e-05
    %v1289 = vrsqrt.pop %v1288
    %v1290 = vmul.f32 %v1287, %v1289
    %v1291 = vld [vmem:[%s8] sm:$0xff]
    %v1292 = vld [vmem:[%s8 + $0x8] sm:$0xff]
    %v1293 = vld [vmem:[%s8 + $0x10] sm:$0xff]
    %v1294 = vld [vmem:[%s8 + $0x18] sm:$0xff]
    %v1295 = vld [vmem:[%s8 + $0x20] sm:$0xff]
    %v1296 = vld [vmem:[%s8 + $0x28] sm:$0x1f]
    %v1297 = vld [vmem:[%s9] sm:$0x1]
    %v1299 = vlaneseq
    %v1300 = vshrl.u32 %v1299, 7
    %v1301 = vsub.s32 0, %v1300
    %v1302 = vrot.slane %v1297, %v1301
    %v1305 = vsel %vm375, %v1290, 0
    %vm1307 = vcmask 1044480
    %v1309 = vsel %vm1307, %v1296, 0
    %1311 = vmatprep.subr.mxu0 0.0
    %1312 = vmatpush1.msra.mxu0 %v1291
    %1313 = vmatprep.subr.mxu0 0.0
    %1314 = vmatpush1.msra.mxu0 %v1292
    %1315 = vmatprep.subr.mxu0 0.0
    %1316 = vmatpush1.msra.mxu0 %v1293
    %1317 = vmatprep.subr.mxu0 0.0
    %1318 = vmatpush1.msra.mxu0 %v1294
    %1319 = vmatprep.subr.mxu0 0.0
    %1320 = vmatpush1.msra.mxu0 %v1295
    %1321 = vmatprep.subr.mxu0 0.0
    %1322 = vmatpush1.msra.mxu0 %v1309
    %1323 = vmatprep.subr.mxu0 0.0
    %1324 = vmatpush1.msra.mxu0 0.0
    %1325 = vmatprep.subr.mxu0 0.0
    %1326 = vmatpush1.msra.mxu0 0.0
    %1327 = vmatprep.subr.mxu0 0.0
    %1328 = vmatpush1.msra.mxu0 0.0
    %1329 = vmatprep.subr.mxu0 0.0
    %1330 = vmatpush1.msra.mxu0 0.0
    %1331 = vmatprep.subr.mxu0 0.0
    %1332 = vmatpush1.msra.mxu0 0.0
    %1333 = vmatprep.subr.mxu0 0.0
    %1334 = vmatpush1.msra.mxu0 0.0
    %1335 = vmatprep.subr.mxu0 0.0
    %1336 = vmatpush1.msra.mxu0 0.0
    %1337 = vmatprep.subr.mxu0 0.0
    %1338 = vmatpush1.msra.mxu0 0.0
    %1339 = vmatprep.subr.mxu0 0.0
    %1340 = vmatpush1.msra.mxu0 0.0
    %1341 = vmatprep.subr.mxu0 0.0
    %1342 = vmatpush1.msra.mxu0 0.0
    %1343 = vmatprep.subr.mxu0 0.0
    %1344 = vmatpush1.msra.mxu0 0.0
    %1345 = vmatprep.subr.mxu0 0.0
    %1346 = vmatpush1.msra.mxu0 0.0
    %1347 = vmatprep.subr.mxu0 0.0
    %1348 = vmatpush1.msra.mxu0 0.0
    %1349 = vmatprep.subr.mxu0 0.0
    %1350 = vmatpush1.msra.mxu0 0.0
    %1351 = vmatprep.subr.mxu0 0.0
    %1352 = vmatpush1.msra.mxu0 0.0
    %1353 = vmatprep.subr.mxu0 0.0
    %1354 = vmatpush1.msra.mxu0 0.0
    %1355 = vmatprep.subr.mxu0 0.0
    %1356 = vmatpush1.msra.mxu0 0.0
    %1357 = vmatprep.subr.mxu0 0.0
    %1358 = vmatpush1.msra.mxu0 0.0
    %1359 = vmatprep.subr.mxu0 0.0
    %1360 = vmatpush1.msra.mxu0 0.0
    %1361 = vmatprep.subr.mxu0 0.0
    %1362 = vmatpush1.msra.mxu0 0.0
    %1363 = vmatprep.subr.mxu0 0.0
    %1364 = vmatpush1.msra.mxu0 0.0
    %1365 = vmatprep.subr.mxu0 0.0
    %1366 = vmatpush1.msra.mxu0 0.0
    %1367 = vmatprep.subr.mxu0 0.0
    %1368 = vmatpush1.msra.mxu0 0.0
    %1369 = vmatprep.subr.mxu0 0.0
    %1370 = vmatpush1.msra.mxu0 0.0
    %1371 = vmatprep.subr.mxu0 0.0
    %1372 = vmatpush1.msra.mxu0 0.0
    %1373 = vmatprep.subr.mxu0 0.0
    %1374 = vmatpush1.msra.mxu0 0.0
    %1375 = vmatprep.mubr.f32.mxu0 0.0
    %1376 = vmatmul.mubr.f32.gmra.mrb[0].mxu0 %v1305
    %v1377 = vpop.f32.mrb[0].mxu0
    %v1378 = vadd.f32 %v1302, %v1377
    %v1379 = vpop.f32.mrb[0].mxu0
    %1380 = vdwg.mxu0
    %vm1381 = vcmask 519168
    %1382 = vst.msk [vmem:[#allocation4] sm:$0xf] %vm1381, %v1378
    // Predicated region
    $region42: #{tpu_custom_call.1} parent=1 // pred_check
      _
    $region43: #{tpu_custom_call.1} parent=1 // pred_check_branch
      %1384 = sbr.rel (0) target = $region45
    $region44: #{tpu_custom_call.1} parent=1 // pred_region
      %s1386 = ssub.s32 64, 64
      %1387 = vsyncadd [#allocation5], %s1386
      %s1389 = sshll.u32 [#allocation4], 4
      %s1390 = int_to_ptr.vmem [resolvable:$true] %s1389
      %1392 = dma.vmem_to_hbm [thread:$0]  %s1390, 64, %s10, [#allocation5]
    $region45: #{tpu_custom_call.1} parent=1 // pred_fallthru
      _
    // Predicated region
    $region46: #{tpu_custom_call.1} parent=1 // pred_check
      _
    $region47: #{tpu_custom_call.1} parent=1 // pred_check_branch
      %1394 = sbr.rel (0) target = $region49
    $region48: #{tpu_custom_call.1} parent=1 // pred_region
      %1395 = dma.done [#allocation5], 64
    $region49: #{tpu_custom_call.1} parent=1 // pred_fallthru
      _
    %1396 = vsyncpa [#allocation5], 1

</llo_original>
